<compile_context>
chip_gen: v7x
topology: tpu7x:2x2x1
jax: 0.10.0
libtpu: 0.0.40
codegen_flags: <defaults>
</compile_context>

<pallas_src>
import functools
import math

import jax
import jax.numpy as jnp
from jax.experimental import pallas as pl
from jax.experimental.pallas import tpu as pltpu


# ---------------------------------------------------------------------------
# Fused Pallas kernel: all LSTM layers + final Linear in one invocation
# ---------------------------------------------------------------------------

def _fused_lstm_kernel(*refs, num_layers, hidden_dims, batch, seq_len):
    """refs = (x_ref, [wih, whh, b] * L, lin_w, lin_b, out_ref).

    x_ref:   (B, T, D0)              batch-first input
    wih:     (D_in, 4H)              gate column order [i, f, o, g]
    whh:     (H, 4H)                 gate column order [i, f, o, g]
    b:       (1, 4H)                 b_ih + b_hh, reordered
    lin_w:   (H_last, latent)
    lin_b:   (1, latent)
    out_ref: (B, T, latent)
    """
    x_ref = refs[0]
    out_ref = refs[-1]
    w_refs = refs[1:-1]

    B, T = batch, seq_len
    d0 = x_ref.shape[-1]

    # Batch-first flattening: row index = b*T + t.
    cur = x_ref[...].reshape(B * T, d0).astype(jnp.float32)

    for layer in range(num_layers):
        wih = w_refs[3 * layer][...]          # (D_in, 4H)
        whh = w_refs[3 * layer + 1][...]      # (H, 4H)
        b = w_refs[3 * layer + 2][...]        # (1, 4H)
        h_dim = hidden_dims[layer]

        # Bulk input projection for every (b, t) at once; bias folded in here
        # so the serial recurrence below only does one small matmul per step.
        proj = jnp.dot(cur, wih, preferred_element_type=jnp.float32) + b
        proj = proj.reshape(B, T, 4 * h_dim)

        h = jnp.zeros((B, h_dim), jnp.float32)
        c = jnp.zeros((B, h_dim), jnp.float32)
        hs = []
        for t in range(T):                    # static unroll (serial recurrence)
            gates = proj[:, t, :] + jnp.dot(h, whh,
                                            preferred_element_type=jnp.float32)
            # gate order [i, f, o, g]: one contiguous sigmoid, one tanh.
            sig = jax.nn.sigmoid(gates[:, :3 * h_dim])
            g_g = jnp.tanh(gates[:, 3 * h_dim:])
            i_g = sig[:, :h_dim]
            f_g = sig[:, h_dim:2 * h_dim]
            o_g = sig[:, 2 * h_dim:3 * h_dim]
            c = f_g * c + i_g * g_g
            h = o_g * jnp.tanh(c)
            hs.append(h)

        # (B, T, H) in batch-first order -> flatten for the next bulk matmul.
        cur = jnp.stack(hs, axis=1).reshape(B * T, h_dim)

    lin_w = w_refs[3 * num_layers][...]       # (H_last, latent)
    lin_b = w_refs[3 * num_layers + 1][...]   # (1, latent)
    y = jnp.dot(cur, lin_w, preferred_element_type=jnp.float32) + lin_b
    out_ref[...] = y.reshape(B, T, -1).astype(out_ref.dtype)


def lstm_module_forward_pallas(x_btd, kparams):
    """x_btd: (B, T, latent) -> (B, T, latent); kparams from prepare_kernel_params."""
    B, T, _ = x_btd.shape
    num_layers = len(kparams["lstm_wih"])
    hidden_dims = tuple(int(w.shape[0]) for w in kparams["lstm_whh"])
    latent = int(kparams["lin_w"].shape[1])

    flat_inputs = [x_btd.astype(jnp.float32)]
    for l in range(num_layers):
        flat_inputs += [kparams["lstm_wih"][l],
                        kparams["lstm_whh"][l],
                        kparams["lstm_b"][l]]
    flat_inputs += [kparams["lin_w"], kparams["lin_b"]]

    kernel = functools.partial(
        _fused_lstm_kernel,
        num_layers=num_layers,
        hidden_dims=hidden_dims,
        batch=B,
        seq_len=T,
    )

    return pl.pallas_call(
        kernel,
        out_shape=jax.ShapeDtypeStruct((B, T, latent), jnp.float32),
        in_specs=[pl.BlockSpec(memory_space=pltpu.MemorySpace.VMEM)]
        * len(flat_inputs),
        out_specs=pl.BlockSpec(memory_space=pltpu.MemorySpace.VMEM),
        compiler_params=pltpu.CompilerParams(
            vmem_limit_bytes=32 * 1024 * 1024),
    )(*flat_inputs)


lstm_module_forward = jax.jit(lstm_module_forward_pallas)


# ---------------------------------------------------------------------------
# Host-side weight preparation (transpose, gate reorder, bias fold)
# ---------------------------------------------------------------------------

def _reorder_gates(w):
    """Reorder leading 4H axis from PyTorch [i, f, g, o] to [i, f, o, g]."""
    H = w.shape[0] // 4
    return jnp.concatenate([w[:2 * H], w[3 * H:], w[2 * H:3 * H]], axis=0)


def prepare_kernel_params(params):
    wihs, whhs, bs = [], [], []
    for (w_ih, w_hh, bias) in params["lstms"]:
        wihs.append(jnp.asarray(_reorder_gates(w_ih).T))            # (D, 4H)
        whhs.append(jnp.asarray(_reorder_gates(w_hh).T))            # (H, 4H)
        bs.append(_reorder_gates(bias).reshape(1, -1))              # (1, 4H)
    return {
        "lstm_wih": wihs,
        "lstm_whh": whhs,
        "lstm_b": bs,
        "lin_w": jnp.asarray(params["lin_w"].T),                    # (H_last, latent)
        "lin_b": params["lin_b"].reshape(1, -1),                    # (1, latent)
    }


# ---------------------------------------------------------------------------
# Pure-JAX reference (PyTorch-layout params) for correctness checking
# ---------------------------------------------------------------------------

def lstm_module_reference(x_btd, params):
    x = x_btd.astype(jnp.float32)
    B = x.shape[0]
    for (w_ih, w_hh, bias) in params["lstms"]:
        H = w_hh.shape[1]

        def step(carry, x_t):
            h, c = carry
            gates = x_t @ w_ih.T + h @ w_hh.T + bias
            i_g = jax.nn.sigmoid(gates[:, 0 * H:1 * H])
            f_g = jax.nn.sigmoid(gates[:, 1 * H:2 * H])
            g_g = jnp.tanh(gates[:, 2 * H:3 * H])
            o_g = jax.nn.sigmoid(gates[:, 3 * H:4 * H])
            c_new = f_g * c + i_g * g_g
            h_new = o_g * jnp.tanh(c_new)
            return (h_new, c_new), h_new

        h0 = jnp.zeros((B, H), jnp.float32)
        c0 = jnp.zeros((B, H), jnp.float32)
        _, hs = jax.lax.scan(step, (h0, c0), jnp.transpose(x, (1, 0, 2)))
        x = jnp.transpose(hs, (1, 0, 2))
    return x @ params["lin_w"].T + params["lin_b"]


# ---------------------------------------------------------------------------
# Deterministic parameter init (PyTorch LSTM-style uniform(-1/sqrt(H), 1/sqrt(H)))
# ---------------------------------------------------------------------------

def init_params(key, latent_dim, lin_hidden_layers):
    hidden_layers = [latent_dim] + list(lin_hidden_layers)
    lstms = []
    for idx in range(len(hidden_layers) - 1):
        d_in, h = hidden_layers[idx], hidden_layers[idx + 1]
        k = 1.0 / math.sqrt(h)
        key, k1, k2, k3, k4 = jax.random.split(key, 5)
        w_ih = jax.random.uniform(k1, (4 * h, d_in), jnp.float32, -k, k)
        w_hh = jax.random.uniform(k2, (4 * h, h), jnp.float32, -k, k)
        b_ih = jax.random.uniform(k3, (4 * h,), jnp.float32, -k, k)
        b_hh = jax.random.uniform(k4, (4 * h,), jnp.float32, -k, k)
        lstms.append((w_ih, w_hh, b_ih + b_hh))   # biases always summed; fold them
    d_last = hidden_layers[-1]
    k = 1.0 / math.sqrt(d_last)
    key, k1, k2 = jax.random.split(key, 3)
    lin_w = jax.random.uniform(k1, (latent_dim, d_last), jnp.float32, -k, k)
    lin_b = jax.random.uniform(k2, (latent_dim,), jnp.float32, -k, k)
    return {"lstms": lstms, "lin_w": lin_w, "lin_b": lin_b}


if __name__ == "__main__":
    # args.meta_latent_dimension = 32, args.lin_hidden_layers = [32, 32]
    LATENT = 32
    HIDDEN_LAYERS = [32, 32]
    BATCH, SEQ = 2, 8

    key = jax.random.PRNGKey(0)
    key, pkey, xkey = jax.random.split(key, 3)
    params = init_params(pkey, LATENT, HIDDEN_LAYERS)
    kparams = prepare_kernel_params(params)      # one-time host-side prep
    x = jax.random.normal(xkey, (BATCH, SEQ, LATENT), jnp.float32)

    out = lstm_module_forward(x, kparams)
    jax.block_until_ready(out)
    assert out.shape == (BATCH, SEQ, LATENT), out.shape

    ref = lstm_module_reference(x, params)
    assert jnp.allclose(out, ref, atol=1e-2, rtol=1e-2), (
        float(jnp.max(jnp.abs(out - ref))))

    print("KERNEL_OK")
</pallas_src>

<mosaic_0001>
module attributes {stable_mosaic.version = 11 : i64} {
  func.func @_fused_lstm_kernel(%arg0: memref<2x8x32xf32, #tpu.memory_space<vmem>>, %arg1: memref<32x128xf32, #tpu.memory_space<vmem>>, %arg2: memref<32x128xf32, #tpu.memory_space<vmem>>, %arg3: memref<1x128xf32, #tpu.memory_space<vmem>>, %arg4: memref<32x128xf32, #tpu.memory_space<vmem>>, %arg5: memref<32x128xf32, #tpu.memory_space<vmem>>, %arg6: memref<1x128xf32, #tpu.memory_space<vmem>>, %arg7: memref<32x32xf32, #tpu.memory_space<vmem>>, %arg8: memref<1x32xf32, #tpu.memory_space<vmem>>, %arg9: memref<2x8x32xf32, #tpu.memory_space<vmem>>) attributes {dimension_semantics = [], scalar_prefetch = 0 : i64, scratch_operands = 0 : i64, tpu.core_type = #tpu.core_type<tc>} {
    %c0 = arith.constant 0 : index
    %c0_0 = arith.constant 0 : index
    %c0_1 = arith.constant 0 : index
    %0 = vector.load %arg0[%c0, %c0_0, %c0_1] : memref<2x8x32xf32, #tpu.memory_space<vmem>>, vector<2x8x32xf32>
    %1 = vector.shape_cast %0 : vector<2x8x32xf32> to vector<16x32xf32>
    %c0_2 = arith.constant 0 : index
    %c0_3 = arith.constant 0 : index
    %2 = vector.load %arg1[%c0_2, %c0_3] : memref<32x128xf32, #tpu.memory_space<vmem>>, vector<32x128xf32>
    %c0_4 = arith.constant 0 : index
    %c0_5 = arith.constant 0 : index
    %3 = vector.load %arg2[%c0_4, %c0_5] : memref<32x128xf32, #tpu.memory_space<vmem>>, vector<32x128xf32>
    %c0_6 = arith.constant 0 : index
    %c0_7 = arith.constant 0 : index
    %4 = vector.load %arg3[%c0_6, %c0_7] : memref<1x128xf32, #tpu.memory_space<vmem>>, vector<1x128xf32>
    %cst = arith.constant dense<0.000000e+00> : vector<16x128xf32>
    %5 = tpu.matmul %1, %2, %cst {dimension_numbers = #tpu.dot_dimension_numbers<[1], [0], [0], [1], [0, 0, 1, 1], [], []>} : vector<16x32xf32>, vector<32x128xf32>, vector<16x128xf32> -> vector<16x128xf32>
    %6 = vector.broadcast %4 : vector<1x128xf32> to vector<16x128xf32>
    %7 = arith.addf %5, %6 : vector<16x128xf32>
    %8 = vector.shape_cast %7 : vector<16x128xf32> to vector<2x8x128xf32>
    %cst_8 = arith.constant 0.000000e+00 : f32
    %9 = vector.broadcast %cst_8 : f32 to vector<2x32xf32>
    %cst_9 = arith.constant 0.000000e+00 : f32
    %10 = vector.broadcast %cst_9 : f32 to vector<2x32xf32>
    %11 = vector.extract_strided_slice %8 {offsets = [0, 0, 0], sizes = [2, 1, 128], strides = [1, 1, 1]} : vector<2x8x128xf32> to vector<2x1x128xf32>
    %12 = vector.shape_cast %11 : vector<2x1x128xf32> to vector<2x128xf32>
    %cst_10 = arith.constant dense<0.000000e+00> : vector<2x128xf32>
    %13 = tpu.matmul %9, %3, %cst_10 {dimension_numbers = #tpu.dot_dimension_numbers<[1], [0], [0], [1], [0, 0, 1, 1], [], []>} : vector<2x32xf32>, vector<32x128xf32>, vector<2x128xf32> -> vector<2x128xf32>
    %14 = arith.addf %12, %13 : vector<2x128xf32>
    %15 = vector.extract_strided_slice %14 {offsets = [0, 0], sizes = [2, 96], strides = [1, 1]} : vector<2x128xf32> to vector<2x96xf32>
    %16 = arith.negf %15 : vector<2x96xf32>
    %17 = math.exp %16 : vector<2x96xf32>
    %cst_11 = arith.constant 1.000000e+00 : f32
    %18 = vector.broadcast %cst_11 : f32 to vector<2x96xf32>
    %19 = arith.addf %18, %17 : vector<2x96xf32>
    %20 = arith.divf %18, %19 : vector<2x96xf32>
    %21 = vector.extract_strided_slice %14 {offsets = [0, 96], sizes = [2, 32], strides = [1, 1]} : vector<2x128xf32> to vector<2x32xf32>
    %22 = math.tanh %21 : vector<2x32xf32>
    %23 = vector.extract_strided_slice %20 {offsets = [0, 0], sizes = [2, 32], strides = [1, 1]} : vector<2x96xf32> to vector<2x32xf32>
    %24 = vector.extract_strided_slice %20 {offsets = [0, 32], sizes = [2, 32], strides = [1, 1]} : vector<2x96xf32> to vector<2x32xf32>
    %25 = vector.extract_strided_slice %20 {offsets = [0, 64], sizes = [2, 32], strides = [1, 1]} : vector<2x96xf32> to vector<2x32xf32>
    %26 = arith.mulf %24, %10 : vector<2x32xf32>
    %27 = arith.mulf %23, %22 : vector<2x32xf32>
    %28 = arith.addf %26, %27 : vector<2x32xf32>
    %29 = math.tanh %28 : vector<2x32xf32>
    %30 = arith.mulf %25, %29 : vector<2x32xf32>
    %31 = vector.extract_strided_slice %8 {offsets = [0, 1, 0], sizes = [2, 1, 128], strides = [1, 1, 1]} : vector<2x8x128xf32> to vector<2x1x128xf32>
    %32 = vector.shape_cast %31 : vector<2x1x128xf32> to vector<2x128xf32>
    %cst_12 = arith.constant dense<0.000000e+00> : vector<2x128xf32>
    %33 = tpu.matmul %30, %3, %cst_12 {dimension_numbers = #tpu.dot_dimension_numbers<[1], [0], [0], [1], [0, 0, 1, 1], [], []>} : vector<2x32xf32>, vector<32x128xf32>, vector<2x128xf32> -> vector<2x128xf32>
    %34 = arith.addf %32, %33 : vector<2x128xf32>
    %35 = vector.extract_strided_slice %34 {offsets = [0, 0], sizes = [2, 96], strides = [1, 1]} : vector<2x128xf32> to vector<2x96xf32>
    %36 = arith.negf %35 : vector<2x96xf32>
    %37 = math.exp %36 : vector<2x96xf32>
    %cst_13 = arith.constant 1.000000e+00 : f32
    %38 = vector.broadcast %cst_13 : f32 to vector<2x96xf32>
    %39 = arith.addf %38, %37 : vector<2x96xf32>
    %40 = arith.divf %38, %39 : vector<2x96xf32>
    %41 = vector.extract_strided_slice %34 {offsets = [0, 96], sizes = [2, 32], strides = [1, 1]} : vector<2x128xf32> to vector<2x32xf32>
    %42 = math.tanh %41 : vector<2x32xf32>
    %43 = vector.extract_strided_slice %40 {offsets = [0, 0], sizes = [2, 32], strides = [1, 1]} : vector<2x96xf32> to vector<2x32xf32>
    %44 = vector.extract_strided_slice %40 {offsets = [0, 32], sizes = [2, 32], strides = [1, 1]} : vector<2x96xf32> to vector<2x32xf32>
    %45 = vector.extract_strided_slice %40 {offsets = [0, 64], sizes = [2, 32], strides = [1, 1]} : vector<2x96xf32> to vector<2x32xf32>
    %46 = arith.mulf %44, %28 : vector<2x32xf32>
    %47 = arith.mulf %43, %42 : vector<2x32xf32>
    %48 = arith.addf %46, %47 : vector<2x32xf32>
    %49 = math.tanh %48 : vector<2x32xf32>
    %50 = arith.mulf %45, %49 : vector<2x32xf32>
    %51 = vector.extract_strided_slice %8 {offsets = [0, 2, 0], sizes = [2, 1, 128], strides = [1, 1, 1]} : vector<2x8x128xf32> to vector<2x1x128xf32>
    %52 = vector.shape_cast %51 : vector<2x1x128xf32> to vector<2x128xf32>
    %cst_14 = arith.constant dense<0.000000e+00> : vector<2x128xf32>
    %53 = tpu.matmul %50, %3, %cst_14 {dimension_numbers = #tpu.dot_dimension_numbers<[1], [0], [0], [1], [0, 0, 1, 1], [], []>} : vector<2x32xf32>, vector<32x128xf32>, vector<2x128xf32> -> vector<2x128xf32>
    %54 = arith.addf %52, %53 : vector<2x128xf32>
    %55 = vector.extract_strided_slice %54 {offsets = [0, 0], sizes = [2, 96], strides = [1, 1]} : vector<2x128xf32> to vector<2x96xf32>
    %56 = arith.negf %55 : vector<2x96xf32>
    %57 = math.exp %56 : vector<2x96xf32>
    %cst_15 = arith.constant 1.000000e+00 : f32
    %58 = vector.broadcast %cst_15 : f32 to vector<2x96xf32>
    %59 = arith.addf %58, %57 : vector<2x96xf32>
    %60 = arith.divf %58, %59 : vector<2x96xf32>
    %61 = vector.extract_strided_slice %54 {offsets = [0, 96], sizes = [2, 32], strides = [1, 1]} : vector<2x128xf32> to vector<2x32xf32>
    %62 = math.tanh %61 : vector<2x32xf32>
    %63 = vector.extract_strided_slice %60 {offsets = [0, 0], sizes = [2, 32], strides = [1, 1]} : vector<2x96xf32> to vector<2x32xf32>
    %64 = vector.extract_strided_slice %60 {offsets = [0, 32], sizes = [2, 32], strides = [1, 1]} : vector<2x96xf32> to vector<2x32xf32>
    %65 = vector.extract_strided_slice %60 {offsets = [0, 64], sizes = [2, 32], strides = [1, 1]} : vector<2x96xf32> to vector<2x32xf32>
    %66 = arith.mulf %64, %48 : vector<2x32xf32>
    %67 = arith.mulf %63, %62 : vector<2x32xf32>
    %68 = arith.addf %66, %67 : vector<2x32xf32>
    %69 = math.tanh %68 : vector<2x32xf32>
    %70 = arith.mulf %65, %69 : vector<2x32xf32>
    %71 = vector.extract_strided_slice %8 {offsets = [0, 3, 0], sizes = [2, 1, 128], strides = [1, 1, 1]} : vector<2x8x128xf32> to vector<2x1x128xf32>
    %72 = vector.shape_cast %71 : vector<2x1x128xf32> to vector<2x128xf32>
    %cst_16 = arith.constant dense<0.000000e+00> : vector<2x128xf32>
    %73 = tpu.matmul %70, %3, %cst_16 {dimension_numbers = #tpu.dot_dimension_numbers<[1], [0], [0], [1], [0, 0, 1, 1], [], []>} : vector<2x32xf32>, vector<32x128xf32>, vector<2x128xf32> -> vector<2x128xf32>
    %74 = arith.addf %72, %73 : vector<2x128xf32>
    %75 = vector.extract_strided_slice %74 {offsets = [0, 0], sizes = [2, 96], strides = [1, 1]} : vector<2x128xf32> to vector<2x96xf32>
    %76 = arith.negf %75 : vector<2x96xf32>
    %77 = math.exp %76 : vector<2x96xf32>
    %cst_17 = arith.constant 1.000000e+00 : f32
    %78 = vector.broadcast %cst_17 : f32 to vector<2x96xf32>
    %79 = arith.addf %78, %77 : vector<2x96xf32>
    %80 = arith.divf %78, %79 : vector<2x96xf32>
    %81 = vector.extract_strided_slice %74 {offsets = [0, 96], sizes = [2, 32], strides = [1, 1]} : vector<2x128xf32> to vector<2x32xf32>
    %82 = math.tanh %81 : vector<2x32xf32>
    %83 = vector.extract_strided_slice %80 {offsets = [0, 0], sizes = [2, 32], strides = [1, 1]} : vector<2x96xf32> to vector<2x32xf32>
    %84 = vector.extract_strided_slice %80 {offsets = [0, 32], sizes = [2, 32], strides = [1, 1]} : vector<2x96xf32> to vector<2x32xf32>
    %85 = vector.extract_strided_slice %80 {offsets = [0, 64], sizes = [2, 32], strides = [1, 1]} : vector<2x96xf32> to vector<2x32xf32>
    %86 = arith.mulf %84, %68 : vector<2x32xf32>
    %87 = arith.mulf %83, %82 : vector<2x32xf32>
    %88 = arith.addf %86, %87 : vector<2x32xf32>
    %89 = math.tanh %88 : vector<2x32xf32>
    %90 = arith.mulf %85, %89 : vector<2x32xf32>
    %91 = vector.extract_strided_slice %8 {offsets = [0, 4, 0], sizes = [2, 1, 128], strides = [1, 1, 1]} : vector<2x8x128xf32> to vector<2x1x128xf32>
    %92 = vector.shape_cast %91 : vector<2x1x128xf32> to vector<2x128xf32>
    %cst_18 = arith.constant dense<0.000000e+00> : vector<2x128xf32>
    %93 = tpu.matmul %90, %3, %cst_18 {dimension_numbers = #tpu.dot_dimension_numbers<[1], [0], [0], [1], [0, 0, 1, 1], [], []>} : vector<2x32xf32>, vector<32x128xf32>, vector<2x128xf32> -> vector<2x128xf32>
    %94 = arith.addf %92, %93 : vector<2x128xf32>
    %95 = vector.extract_strided_slice %94 {offsets = [0, 0], sizes = [2, 96], strides = [1, 1]} : vector<2x128xf32> to vector<2x96xf32>
    %96 = arith.negf %95 : vector<2x96xf32>
    %97 = math.exp %96 : vector<2x96xf32>
    %cst_19 = arith.constant 1.000000e+00 : f32
    %98 = vector.broadcast %cst_19 : f32 to vector<2x96xf32>
    %99 = arith.addf %98, %97 : vector<2x96xf32>
    %100 = arith.divf %98, %99 : vector<2x96xf32>
    %101 = vector.extract_strided_slice %94 {offsets = [0, 96], sizes = [2, 32], strides = [1, 1]} : vector<2x128xf32> to vector<2x32xf32>
    %102 = math.tanh %101 : vector<2x32xf32>
    %103 = vector.extract_strided_slice %100 {offsets = [0, 0], sizes = [2, 32], strides = [1, 1]} : vector<2x96xf32> to vector<2x32xf32>
    %104 = vector.extract_strided_slice %100 {offsets = [0, 32], sizes = [2, 32], strides = [1, 1]} : vector<2x96xf32> to vector<2x32xf32>
    %105 = vector.extract_strided_slice %100 {offsets = [0, 64], sizes = [2, 32], strides = [1, 1]} : vector<2x96xf32> to vector<2x32xf32>
    %106 = arith.mulf %104, %88 : vector<2x32xf32>
    %107 = arith.mulf %103, %102 : vector<2x32xf32>
    %108 = arith.addf %106, %107 : vector<2x32xf32>
    %109 = math.tanh %108 : vector<2x32xf32>
    %110 = arith.mulf %105, %109 : vector<2x32xf32>
    %111 = vector.extract_strided_slice %8 {offsets = [0, 5, 0], sizes = [2, 1, 128], strides = [1, 1, 1]} : vector<2x8x128xf32> to vector<2x1x128xf32>
    %112 = vector.shape_cast %111 : vector<2x1x128xf32> to vector<2x128xf32>
    %cst_20 = arith.constant dense<0.000000e+00> : vector<2x128xf32>
    %113 = tpu.matmul %110, %3, %cst_20 {dimension_numbers = #tpu.dot_dimension_numbers<[1], [0], [0], [1], [0, 0, 1, 1], [], []>} : vector<2x32xf32>, vector<32x128xf32>, vector<2x128xf32> -> vector<2x128xf32>
    %114 = arith.addf %112, %113 : vector<2x128xf32>
    %115 = vector.extract_strided_slice %114 {offsets = [0, 0], sizes = [2, 96], strides = [1, 1]} : vector<2x128xf32> to vector<2x96xf32>
    %116 = arith.negf %115 : vector<2x96xf32>
    %117 = math.exp %116 : vector<2x96xf32>
    %cst_21 = arith.constant 1.000000e+00 : f32
    %118 = vector.broadcast %cst_21 : f32 to vector<2x96xf32>
    %119 = arith.addf %118, %117 : vector<2x96xf32>
    %120 = arith.divf %118, %119 : vector<2x96xf32>
    %121 = vector.extract_strided_slice %114 {offsets = [0, 96], sizes = [2, 32], strides = [1, 1]} : vector<2x128xf32> to vector<2x32xf32>
    %122 = math.tanh %121 : vector<2x32xf32>
    %123 = vector.extract_strided_slice %120 {offsets = [0, 0], sizes = [2, 32], strides = [1, 1]} : vector<2x96xf32> to vector<2x32xf32>
    %124 = vector.extract_strided_slice %120 {offsets = [0, 32], sizes = [2, 32], strides = [1, 1]} : vector<2x96xf32> to vector<2x32xf32>
    %125 = vector.extract_strided_slice %120 {offsets = [0, 64], sizes = [2, 32], strides = [1, 1]} : vector<2x96xf32> to vector<2x32xf32>
    %126 = arith.mulf %124, %108 : vector<2x32xf32>
    %127 = arith.mulf %123, %122 : vector<2x32xf32>
    %128 = arith.addf %126, %127 : vector<2x32xf32>
    %129 = math.tanh %128 : vector<2x32xf32>
    %130 = arith.mulf %125, %129 : vector<2x32xf32>
    %131 = vector.extract_strided_slice %8 {offsets = [0, 6, 0], sizes = [2, 1, 128], strides = [1, 1, 1]} : vector<2x8x128xf32> to vector<2x1x128xf32>
    %132 = vector.shape_cast %131 : vector<2x1x128xf32> to vector<2x128xf32>
    %cst_22 = arith.constant dense<0.000000e+00> : vector<2x128xf32>
    %133 = tpu.matmul %130, %3, %cst_22 {dimension_numbers = #tpu.dot_dimension_numbers<[1], [0], [0], [1], [0, 0, 1, 1], [], []>} : vector<2x32xf32>, vector<32x128xf32>, vector<2x128xf32> -> vector<2x128xf32>
    %134 = arith.addf %132, %133 : vector<2x128xf32>
    %135 = vector.extract_strided_slice %134 {offsets = [0, 0], sizes = [2, 96], strides = [1, 1]} : vector<2x128xf32> to vector<2x96xf32>
    %136 = arith.negf %135 : vector<2x96xf32>
    %137 = math.exp %136 : vector<2x96xf32>
    %cst_23 = arith.constant 1.000000e+00 : f32
    %138 = vector.broadcast %cst_23 : f32 to vector<2x96xf32>
    %139 = arith.addf %138, %137 : vector<2x96xf32>
    %140 = arith.divf %138, %139 : vector<2x96xf32>
    %141 = vector.extract_strided_slice %134 {offsets = [0, 96], sizes = [2, 32], strides = [1, 1]} : vector<2x128xf32> to vector<2x32xf32>
    %142 = math.tanh %141 : vector<2x32xf32>
    %143 = vector.extract_strided_slice %140 {offsets = [0, 0], sizes = [2, 32], strides = [1, 1]} : vector<2x96xf32> to vector<2x32xf32>
    %144 = vector.extract_strided_slice %140 {offsets = [0, 32], sizes = [2, 32], strides = [1, 1]} : vector<2x96xf32> to vector<2x32xf32>
    %145 = vector.extract_strided_slice %140 {offsets = [0, 64], sizes = [2, 32], strides = [1, 1]} : vector<2x96xf32> to vector<2x32xf32>
    %146 = arith.mulf %144, %128 : vector<2x32xf32>
    %147 = arith.mulf %143, %142 : vector<2x32xf32>
    %148 = arith.addf %146, %147 : vector<2x32xf32>
    %149 = math.tanh %148 : vector<2x32xf32>
    %150 = arith.mulf %145, %149 : vector<2x32xf32>
    %151 = vector.extract_strided_slice %8 {offsets = [0, 7, 0], sizes = [2, 1, 128], strides = [1, 1, 1]} : vector<2x8x128xf32> to vector<2x1x128xf32>
    %152 = vector.shape_cast %151 : vector<2x1x128xf32> to vector<2x128xf32>
    %cst_24 = arith.constant dense<0.000000e+00> : vector<2x128xf32>
    %153 = tpu.matmul %150, %3, %cst_24 {dimension_numbers = #tpu.dot_dimension_numbers<[1], [0], [0], [1], [0, 0, 1, 1], [], []>} : vector<2x32xf32>, vector<32x128xf32>, vector<2x128xf32> -> vector<2x128xf32>
    %154 = arith.addf %152, %153 : vector<2x128xf32>
    %155 = vector.extract_strided_slice %154 {offsets = [0, 0], sizes = [2, 96], strides = [1, 1]} : vector<2x128xf32> to vector<2x96xf32>
    %156 = arith.negf %155 : vector<2x96xf32>
    %157 = math.exp %156 : vector<2x96xf32>
    %cst_25 = arith.constant 1.000000e+00 : f32
    %158 = vector.broadcast %cst_25 : f32 to vector<2x96xf32>
    %159 = arith.addf %158, %157 : vector<2x96xf32>
    %160 = arith.divf %158, %159 : vector<2x96xf32>
    %161 = vector.extract_strided_slice %154 {offsets = [0, 96], sizes = [2, 32], strides = [1, 1]} : vector<2x128xf32> to vector<2x32xf32>
    %162 = math.tanh %161 : vector<2x32xf32>
    %163 = vector.extract_strided_slice %160 {offsets = [0, 0], sizes = [2, 32], strides = [1, 1]} : vector<2x96xf32> to vector<2x32xf32>
    %164 = vector.extract_strided_slice %160 {offsets = [0, 32], sizes = [2, 32], strides = [1, 1]} : vector<2x96xf32> to vector<2x32xf32>
    %165 = vector.extract_strided_slice %160 {offsets = [0, 64], sizes = [2, 32], strides = [1, 1]} : vector<2x96xf32> to vector<2x32xf32>
    %166 = arith.mulf %164, %148 : vector<2x32xf32>
    %167 = arith.mulf %163, %162 : vector<2x32xf32>
    %168 = arith.addf %166, %167 : vector<2x32xf32>
    %169 = math.tanh %168 : vector<2x32xf32>
    %170 = arith.mulf %165, %169 : vector<2x32xf32>
    %171 = vector.shape_cast %30 : vector<2x32xf32> to vector<2x1x32xf32>
    %172 = vector.shape_cast %50 : vector<2x32xf32> to vector<2x1x32xf32>
    %173 = vector.shape_cast %70 : vector<2x32xf32> to vector<2x1x32xf32>
    %174 = vector.shape_cast %90 : vector<2x32xf32> to vector<2x1x32xf32>
    %175 = vector.shape_cast %110 : vector<2x32xf32> to vector<2x1x32xf32>
    %176 = vector.shape_cast %130 : vector<2x32xf32> to vector<2x1x32xf32>
    %177 = vector.shape_cast %150 : vector<2x32xf32> to vector<2x1x32xf32>
    %178 = vector.shape_cast %170 : vector<2x32xf32> to vector<2x1x32xf32>
    %179 = tpu.concatenate %171, %172, %173, %174, %175, %176, %177, %178 in 1 : vector<2x1x32xf32>, vector<2x1x32xf32>, vector<2x1x32xf32>, vector<2x1x32xf32>, vector<2x1x32xf32>, vector<2x1x32xf32>, vector<2x1x32xf32>, vector<2x1x32xf32> -> vector<2x8x32xf32>
    %180 = vector.shape_cast %179 : vector<2x8x32xf32> to vector<16x32xf32>
    %c0_26 = arith.constant 0 : index
    %c0_27 = arith.constant 0 : index
    %181 = vector.load %arg4[%c0_26, %c0_27] : memref<32x128xf32, #tpu.memory_space<vmem>>, vector<32x128xf32>
    %c0_28 = arith.constant 0 : index
    %c0_29 = arith.constant 0 : index
    %182 = vector.load %arg5[%c0_28, %c0_29] : memref<32x128xf32, #tpu.memory_space<vmem>>, vector<32x128xf32>
    %c0_30 = arith.constant 0 : index
    %c0_31 = arith.constant 0 : index
    %183 = vector.load %arg6[%c0_30, %c0_31] : memref<1x128xf32, #tpu.memory_space<vmem>>, vector<1x128xf32>
    %cst_32 = arith.constant dense<0.000000e+00> : vector<16x128xf32>
    %184 = tpu.matmul %180, %181, %cst_32 {dimension_numbers = #tpu.dot_dimension_numbers<[1], [0], [0], [1], [0, 0, 1, 1], [], []>} : vector<16x32xf32>, vector<32x128xf32>, vector<16x128xf32> -> vector<16x128xf32>
    %185 = vector.broadcast %183 : vector<1x128xf32> to vector<16x128xf32>
    %186 = arith.addf %184, %185 : vector<16x128xf32>
    %187 = vector.shape_cast %186 : vector<16x128xf32> to vector<2x8x128xf32>
    %cst_33 = arith.constant 0.000000e+00 : f32
    %188 = vector.broadcast %cst_33 : f32 to vector<2x32xf32>
    %cst_34 = arith.constant 0.000000e+00 : f32
    %189 = vector.broadcast %cst_34 : f32 to vector<2x32xf32>
    %190 = vector.extract_strided_slice %187 {offsets = [0, 0, 0], sizes = [2, 1, 128], strides = [1, 1, 1]} : vector<2x8x128xf32> to vector<2x1x128xf32>
    %191 = vector.shape_cast %190 : vector<2x1x128xf32> to vector<2x128xf32>
    %cst_35 = arith.constant dense<0.000000e+00> : vector<2x128xf32>
    %192 = tpu.matmul %188, %182, %cst_35 {dimension_numbers = #tpu.dot_dimension_numbers<[1], [0], [0], [1], [0, 0, 1, 1], [], []>} : vector<2x32xf32>, vector<32x128xf32>, vector<2x128xf32> -> vector<2x128xf32>
    %193 = arith.addf %191, %192 : vector<2x128xf32>
    %194 = vector.extract_strided_slice %193 {offsets = [0, 0], sizes = [2, 96], strides = [1, 1]} : vector<2x128xf32> to vector<2x96xf32>
    %195 = arith.negf %194 : vector<2x96xf32>
    %196 = math.exp %195 : vector<2x96xf32>
    %cst_36 = arith.constant 1.000000e+00 : f32
    %197 = vector.broadcast %cst_36 : f32 to vector<2x96xf32>
    %198 = arith.addf %197, %196 : vector<2x96xf32>
    %199 = arith.divf %197, %198 : vector<2x96xf32>
    %200 = vector.extract_strided_slice %193 {offsets = [0, 96], sizes = [2, 32], strides = [1, 1]} : vector<2x128xf32> to vector<2x32xf32>
    %201 = math.tanh %200 : vector<2x32xf32>
    %202 = vector.extract_strided_slice %199 {offsets = [0, 0], sizes = [2, 32], strides = [1, 1]} : vector<2x96xf32> to vector<2x32xf32>
    %203 = vector.extract_strided_slice %199 {offsets = [0, 32], sizes = [2, 32], strides = [1, 1]} : vector<2x96xf32> to vector<2x32xf32>
    %204 = vector.extract_strided_slice %199 {offsets = [0, 64], sizes = [2, 32], strides = [1, 1]} : vector<2x96xf32> to vector<2x32xf32>
    %205 = arith.mulf %203, %189 : vector<2x32xf32>
    %206 = arith.mulf %202, %201 : vector<2x32xf32>
    %207 = arith.addf %205, %206 : vector<2x32xf32>
    %208 = math.tanh %207 : vector<2x32xf32>
    %209 = arith.mulf %204, %208 : vector<2x32xf32>
    %210 = vector.extract_strided_slice %187 {offsets = [0, 1, 0], sizes = [2, 1, 128], strides = [1, 1, 1]} : vector<2x8x128xf32> to vector<2x1x128xf32>
    %211 = vector.shape_cast %210 : vector<2x1x128xf32> to vector<2x128xf32>
    %cst_37 = arith.constant dense<0.000000e+00> : vector<2x128xf32>
    %212 = tpu.matmul %209, %182, %cst_37 {dimension_numbers = #tpu.dot_dimension_numbers<[1], [0], [0], [1], [0, 0, 1, 1], [], []>} : vector<2x32xf32>, vector<32x128xf32>, vector<2x128xf32> -> vector<2x128xf32>
    %213 = arith.addf %211, %212 : vector<2x128xf32>
    %214 = vector.extract_strided_slice %213 {offsets = [0, 0], sizes = [2, 96], strides = [1, 1]} : vector<2x128xf32> to vector<2x96xf32>
    %215 = arith.negf %214 : vector<2x96xf32>
    %216 = math.exp %215 : vector<2x96xf32>
    %cst_38 = arith.constant 1.000000e+00 : f32
    %217 = vector.broadcast %cst_38 : f32 to vector<2x96xf32>
    %218 = arith.addf %217, %216 : vector<2x96xf32>
    %219 = arith.divf %217, %218 : vector<2x96xf32>
    %220 = vector.extract_strided_slice %213 {offsets = [0, 96], sizes = [2, 32], strides = [1, 1]} : vector<2x128xf32> to vector<2x32xf32>
    %221 = math.tanh %220 : vector<2x32xf32>
    %222 = vector.extract_strided_slice %219 {offsets = [0, 0], sizes = [2, 32], strides = [1, 1]} : vector<2x96xf32> to vector<2x32xf32>
    %223 = vector.extract_strided_slice %219 {offsets = [0, 32], sizes = [2, 32], strides = [1, 1]} : vector<2x96xf32> to vector<2x32xf32>
    %224 = vector.extract_strided_slice %219 {offsets = [0, 64], sizes = [2, 32], strides = [1, 1]} : vector<2x96xf32> to vector<2x32xf32>
    %225 = arith.mulf %223, %207 : vector<2x32xf32>
    %226 = arith.mulf %222, %221 : vector<2x32xf32>
    %227 = arith.addf %225, %226 : vector<2x32xf32>
    %228 = math.tanh %227 : vector<2x32xf32>
    %229 = arith.mulf %224, %228 : vector<2x32xf32>
    %230 = vector.extract_strided_slice %187 {offsets = [0, 2, 0], sizes = [2, 1, 128], strides = [1, 1, 1]} : vector<2x8x128xf32> to vector<2x1x128xf32>
    %231 = vector.shape_cast %230 : vector<2x1x128xf32> to vector<2x128xf32>
    %cst_39 = arith.constant dense<0.000000e+00> : vector<2x128xf32>
    %232 = tpu.matmul %229, %182, %cst_39 {dimension_numbers = #tpu.dot_dimension_numbers<[1], [0], [0], [1], [0, 0, 1, 1], [], []>} : vector<2x32xf32>, vector<32x128xf32>, vector<2x128xf32> -> vector<2x128xf32>
    %233 = arith.addf %231, %232 : vector<2x128xf32>
    %234 = vector.extract_strided_slice %233 {offsets = [0, 0], sizes = [2, 96], strides = [1, 1]} : vector<2x128xf32> to vector<2x96xf32>
    %235 = arith.negf %234 : vector<2x96xf32>
    %236 = math.exp %235 : vector<2x96xf32>
    %cst_40 = arith.constant 1.000000e+00 : f32
    %237 = vector.broadcast %cst_40 : f32 to vector<2x96xf32>
    %238 = arith.addf %237, %236 : vector<2x96xf32>
    %239 = arith.divf %237, %238 : vector<2x96xf32>
    %240 = vector.extract_strided_slice %233 {offsets = [0, 96], sizes = [2, 32], strides = [1, 1]} : vector<2x128xf32> to vector<2x32xf32>
    %241 = math.tanh %240 : vector<2x32xf32>
    %242 = vector.extract_strided_slice %239 {offsets = [0, 0], sizes = [2, 32], strides = [1, 1]} : vector<2x96xf32> to vector<2x32xf32>
    %243 = vector.extract_strided_slice %239 {offsets = [0, 32], sizes = [2, 32], strides = [1, 1]} : vector<2x96xf32> to vector<2x32xf32>
    %244 = vector.extract_strided_slice %239 {offsets = [0, 64], sizes = [2, 32], strides = [1, 1]} : vector<2x96xf32> to vector<2x32xf32>
    %245 = arith.mulf %243, %227 : vector<2x32xf32>
    %246 = arith.mulf %242, %241 : vector<2x32xf32>
    %247 = arith.addf %245, %246 : vector<2x32xf32>
    %248 = math.tanh %247 : vector<2x32xf32>
    %249 = arith.mulf %244, %248 : vector<2x32xf32>
    %250 = vector.extract_strided_slice %187 {offsets = [0, 3, 0], sizes = [2, 1, 128], strides = [1, 1, 1]} : vector<2x8x128xf32> to vector<2x1x128xf32>
    %251 = vector.shape_cast %250 : vector<2x1x128xf32> to vector<2x128xf32>
    %cst_41 = arith.constant dense<0.000000e+00> : vector<2x128xf32>
    %252 = tpu.matmul %249, %182, %cst_41 {dimension_numbers = #tpu.dot_dimension_numbers<[1], [0], [0], [1], [0, 0, 1, 1], [], []>} : vector<2x32xf32>, vector<32x128xf32>, vector<2x128xf32> -> vector<2x128xf32>
    %253 = arith.addf %251, %252 : vector<2x128xf32>
    %254 = vector.extract_strided_slice %253 {offsets = [0, 0], sizes = [2, 96], strides = [1, 1]} : vector<2x128xf32> to vector<2x96xf32>
    %255 = arith.negf %254 : vector<2x96xf32>
    %256 = math.exp %255 : vector<2x96xf32>
    %cst_42 = arith.constant 1.000000e+00 : f32
    %257 = vector.broadcast %cst_42 : f32 to vector<2x96xf32>
    %258 = arith.addf %257, %256 : vector<2x96xf32>
    %259 = arith.divf %257, %258 : vector<2x96xf32>
    %260 = vector.extract_strided_slice %253 {offsets = [0, 96], sizes = [2, 32], strides = [1, 1]} : vector<2x128xf32> to vector<2x32xf32>
    %261 = math.tanh %260 : vector<2x32xf32>
    %262 = vector.extract_strided_slice %259 {offsets = [0, 0], sizes = [2, 32], strides = [1, 1]} : vector<2x96xf32> to vector<2x32xf32>
    %263 = vector.extract_strided_slice %259 {offsets = [0, 32], sizes = [2, 32], strides = [1, 1]} : vector<2x96xf32> to vector<2x32xf32>
    %264 = vector.extract_strided_slice %259 {offsets = [0, 64], sizes = [2, 32], strides = [1, 1]} : vector<2x96xf32> to vector<2x32xf32>
    %265 = arith.mulf %263, %247 : vector<2x32xf32>
    %266 = arith.mulf %262, %261 : vector<2x32xf32>
    %267 = arith.addf %265, %266 : vector<2x32xf32>
    %268 = math.tanh %267 : vector<2x32xf32>
    %269 = arith.mulf %264, %268 : vector<2x32xf32>
    %270 = vector.extract_strided_slice %187 {offsets = [0, 4, 0], sizes = [2, 1, 128], strides = [1, 1, 1]} : vector<2x8x128xf32> to vector<2x1x128xf32>
    %271 = vector.shape_cast %270 : vector<2x1x128xf32> to vector<2x128xf32>
    %cst_43 = arith.constant dense<0.000000e+00> : vector<2x128xf32>
    %272 = tpu.matmul %269, %182, %cst_43 {dimension_numbers = #tpu.dot_dimension_numbers<[1], [0], [0], [1], [0, 0, 1, 1], [], []>} : vector<2x32xf32>, vector<32x128xf32>, vector<2x128xf32> -> vector<2x128xf32>
    %273 = arith.addf %271, %272 : vector<2x128xf32>
    %274 = vector.extract_strided_slice %273 {offsets = [0, 0], sizes = [2, 96], strides = [1, 1]} : vector<2x128xf32> to vector<2x96xf32>
    %275 = arith.negf %274 : vector<2x96xf32>
    %276 = math.exp %275 : vector<2x96xf32>
    %cst_44 = arith.constant 1.000000e+00 : f32
    %277 = vector.broadcast %cst_44 : f32 to vector<2x96xf32>
    %278 = arith.addf %277, %276 : vector<2x96xf32>
    %279 = arith.divf %277, %278 : vector<2x96xf32>
    %280 = vector.extract_strided_slice %273 {offsets = [0, 96], sizes = [2, 32], strides = [1, 1]} : vector<2x128xf32> to vector<2x32xf32>
    %281 = math.tanh %280 : vector<2x32xf32>
    %282 = vector.extract_strided_slice %279 {offsets = [0, 0], sizes = [2, 32], strides = [1, 1]} : vector<2x96xf32> to vector<2x32xf32>
    %283 = vector.extract_strided_slice %279 {offsets = [0, 32], sizes = [2, 32], strides = [1, 1]} : vector<2x96xf32> to vector<2x32xf32>
    %284 = vector.extract_strided_slice %279 {offsets = [0, 64], sizes = [2, 32], strides = [1, 1]} : vector<2x96xf32> to vector<2x32xf32>
    %285 = arith.mulf %283, %267 : vector<2x32xf32>
    %286 = arith.mulf %282, %281 : vector<2x32xf32>
    %287 = arith.addf %285, %286 : vector<2x32xf32>
    %288 = math.tanh %287 : vector<2x32xf32>
    %289 = arith.mulf %284, %288 : vector<2x32xf32>
    %290 = vector.extract_strided_slice %187 {offsets = [0, 5, 0], sizes = [2, 1, 128], strides = [1, 1, 1]} : vector<2x8x128xf32> to vector<2x1x128xf32>
    %291 = vector.shape_cast %290 : vector<2x1x128xf32> to vector<2x128xf32>
    %cst_45 = arith.constant dense<0.000000e+00> : vector<2x128xf32>
    %292 = tpu.matmul %289, %182, %cst_45 {dimension_numbers = #tpu.dot_dimension_numbers<[1], [0], [0], [1], [0, 0, 1, 1], [], []>} : vector<2x32xf32>, vector<32x128xf32>, vector<2x128xf32> -> vector<2x128xf32>
    %293 = arith.addf %291, %292 : vector<2x128xf32>
    %294 = vector.extract_strided_slice %293 {offsets = [0, 0], sizes = [2, 96], strides = [1, 1]} : vector<2x128xf32> to vector<2x96xf32>
    %295 = arith.negf %294 : vector<2x96xf32>
    %296 = math.exp %295 : vector<2x96xf32>
    %cst_46 = arith.constant 1.000000e+00 : f32
    %297 = vector.broadcast %cst_46 : f32 to vector<2x96xf32>
    %298 = arith.addf %297, %296 : vector<2x96xf32>
    %299 = arith.divf %297, %298 : vector<2x96xf32>
    %300 = vector.extract_strided_slice %293 {offsets = [0, 96], sizes = [2, 32], strides = [1, 1]} : vector<2x128xf32> to vector<2x32xf32>
    %301 = math.tanh %300 : vector<2x32xf32>
    %302 = vector.extract_strided_slice %299 {offsets = [0, 0], sizes = [2, 32], strides = [1, 1]} : vector<2x96xf32> to vector<2x32xf32>
    %303 = vector.extract_strided_slice %299 {offsets = [0, 32], sizes = [2, 32], strides = [1, 1]} : vector<2x96xf32> to vector<2x32xf32>
    %304 = vector.extract_strided_slice %299 {offsets = [0, 64], sizes = [2, 32], strides = [1, 1]} : vector<2x96xf32> to vector<2x32xf32>
    %305 = arith.mulf %303, %287 : vector<2x32xf32>
    %306 = arith.mulf %302, %301 : vector<2x32xf32>
    %307 = arith.addf %305, %306 : vector<2x32xf32>
    %308 = math.tanh %307 : vector<2x32xf32>
    %309 = arith.mulf %304, %308 : vector<2x32xf32>
    %310 = vector.extract_strided_slice %187 {offsets = [0, 6, 0], sizes = [2, 1, 128], strides = [1, 1, 1]} : vector<2x8x128xf32> to vector<2x1x128xf32>
    %311 = vector.shape_cast %310 : vector<2x1x128xf32> to vector<2x128xf32>
    %cst_47 = arith.constant dense<0.000000e+00> : vector<2x128xf32>
    %312 = tpu.matmul %309, %182, %cst_47 {dimension_numbers = #tpu.dot_dimension_numbers<[1], [0], [0], [1], [0, 0, 1, 1], [], []>} : vector<2x32xf32>, vector<32x128xf32>, vector<2x128xf32> -> vector<2x128xf32>
    %313 = arith.addf %311, %312 : vector<2x128xf32>
    %314 = vector.extract_strided_slice %313 {offsets = [0, 0], sizes = [2, 96], strides = [1, 1]} : vector<2x128xf32> to vector<2x96xf32>
    %315 = arith.negf %314 : vector<2x96xf32>
    %316 = math.exp %315 : vector<2x96xf32>
    %cst_48 = arith.constant 1.000000e+00 : f32
    %317 = vector.broadcast %cst_48 : f32 to vector<2x96xf32>
    %318 = arith.addf %317, %316 : vector<2x96xf32>
    %319 = arith.divf %317, %318 : vector<2x96xf32>
    %320 = vector.extract_strided_slice %313 {offsets = [0, 96], sizes = [2, 32], strides = [1, 1]} : vector<2x128xf32> to vector<2x32xf32>
    %321 = math.tanh %320 : vector<2x32xf32>
    %322 = vector.extract_strided_slice %319 {offsets = [0, 0], sizes = [2, 32], strides = [1, 1]} : vector<2x96xf32> to vector<2x32xf32>
    %323 = vector.extract_strided_slice %319 {offsets = [0, 32], sizes = [2, 32], strides = [1, 1]} : vector<2x96xf32> to vector<2x32xf32>
    %324 = vector.extract_strided_slice %319 {offsets = [0, 64], sizes = [2, 32], strides = [1, 1]} : vector<2x96xf32> to vector<2x32xf32>
    %325 = arith.mulf %323, %307 : vector<2x32xf32>
    %326 = arith.mulf %322, %321 : vector<2x32xf32>
    %327 = arith.addf %325, %326 : vector<2x32xf32>
    %328 = math.tanh %327 : vector<2x32xf32>
    %329 = arith.mulf %324, %328 : vector<2x32xf32>
    %330 = vector.extract_strided_slice %187 {offsets = [0, 7, 0], sizes = [2, 1, 128], strides = [1, 1, 1]} : vector<2x8x128xf32> to vector<2x1x128xf32>
    %331 = vector.shape_cast %330 : vector<2x1x128xf32> to vector<2x128xf32>
    %cst_49 = arith.constant dense<0.000000e+00> : vector<2x128xf32>
    %332 = tpu.matmul %329, %182, %cst_49 {dimension_numbers = #tpu.dot_dimension_numbers<[1], [0], [0], [1], [0, 0, 1, 1], [], []>} : vector<2x32xf32>, vector<32x128xf32>, vector<2x128xf32> -> vector<2x128xf32>
    %333 = arith.addf %331, %332 : vector<2x128xf32>
    %334 = vector.extract_strided_slice %333 {offsets = [0, 0], sizes = [2, 96], strides = [1, 1]} : vector<2x128xf32> to vector<2x96xf32>
    %335 = arith.negf %334 : vector<2x96xf32>
    %336 = math.exp %335 : vector<2x96xf32>
    %cst_50 = arith.constant 1.000000e+00 : f32
    %337 = vector.broadcast %cst_50 : f32 to vector<2x96xf32>
    %338 = arith.addf %337, %336 : vector<2x96xf32>
    %339 = arith.divf %337, %338 : vector<2x96xf32>
    %340 = vector.extract_strided_slice %333 {offsets = [0, 96], sizes = [2, 32], strides = [1, 1]} : vector<2x128xf32> to vector<2x32xf32>
    %341 = math.tanh %340 : vector<2x32xf32>
    %342 = vector.extract_strided_slice %339 {offsets = [0, 0], sizes = [2, 32], strides = [1, 1]} : vector<2x96xf32> to vector<2x32xf32>
    %343 = vector.extract_strided_slice %339 {offsets = [0, 32], sizes = [2, 32], strides = [1, 1]} : vector<2x96xf32> to vector<2x32xf32>
    %344 = vector.extract_strided_slice %339 {offsets = [0, 64], sizes = [2, 32], strides = [1, 1]} : vector<2x96xf32> to vector<2x32xf32>
    %345 = arith.mulf %343, %327 : vector<2x32xf32>
    %346 = arith.mulf %342, %341 : vector<2x32xf32>
    %347 = arith.addf %345, %346 : vector<2x32xf32>
    %348 = math.tanh %347 : vector<2x32xf32>
    %349 = arith.mulf %344, %348 : vector<2x32xf32>
    %350 = vector.shape_cast %209 : vector<2x32xf32> to vector<2x1x32xf32>
    %351 = vector.shape_cast %229 : vector<2x32xf32> to vector<2x1x32xf32>
    %352 = vector.shape_cast %249 : vector<2x32xf32> to vector<2x1x32xf32>
    %353 = vector.shape_cast %269 : vector<2x32xf32> to vector<2x1x32xf32>
    %354 = vector.shape_cast %289 : vector<2x32xf32> to vector<2x1x32xf32>
    %355 = vector.shape_cast %309 : vector<2x32xf32> to vector<2x1x32xf32>
    %356 = vector.shape_cast %329 : vector<2x32xf32> to vector<2x1x32xf32>
    %357 = vector.shape_cast %349 : vector<2x32xf32> to vector<2x1x32xf32>
    %358 = tpu.concatenate %350, %351, %352, %353, %354, %355, %356, %357 in 1 : vector<2x1x32xf32>, vector<2x1x32xf32>, vector<2x1x32xf32>, vector<2x1x32xf32>, vector<2x1x32xf32>, vector<2x1x32xf32>, vector<2x1x32xf32>, vector<2x1x32xf32> -> vector<2x8x32xf32>
    %359 = vector.shape_cast %358 : vector<2x8x32xf32> to vector<16x32xf32>
    %c0_51 = arith.constant 0 : index
    %c0_52 = arith.constant 0 : index
    %360 = vector.load %arg7[%c0_51, %c0_52] : memref<32x32xf32, #tpu.memory_space<vmem>>, vector<32x32xf32>
    %c0_53 = arith.constant 0 : index
    %c0_54 = arith.constant 0 : index
    %361 = vector.load %arg8[%c0_53, %c0_54] : memref<1x32xf32, #tpu.memory_space<vmem>>, vector<1x32xf32>
    %cst_55 = arith.constant dense<0.000000e+00> : vector<16x32xf32>
    %362 = tpu.matmul %359, %360, %cst_55 {dimension_numbers = #tpu.dot_dimension_numbers<[1], [0], [0], [1], [0, 0, 1, 1], [], []>} : vector<16x32xf32>, vector<32x32xf32>, vector<16x32xf32> -> vector<16x32xf32>
    %363 = vector.broadcast %361 : vector<1x32xf32> to vector<16x32xf32>
    %364 = arith.addf %362, %363 : vector<16x32xf32>
    %365 = vector.shape_cast %364 : vector<16x32xf32> to vector<2x8x32xf32>
    %c0_56 = arith.constant 0 : index
    %c0_57 = arith.constant 0 : index
    %c0_58 = arith.constant 0 : index
    %366 = vector.load %arg9[%c0_56, %c0_57, %c0_58] : memref<2x8x32xf32, #tpu.memory_space<vmem>>, vector<2x8x32xf32>
    tpu.vector_store %arg9[%c0_56, %c0_57, %c0_58], %365 {strides = array<i32>} : memref<2x8x32xf32, #tpu.memory_space<vmem>>, vector<2x8x32xf32>,
    return
  }
}

</mosaic_0001>

<llo_original>
// kernel: lstm_module_forward_pallas.1
$region0: #{lstm_module_forward_pallas.1}
  #allocation0 [shape = 'u32[]', space=smem, size = 0x4, offset = 0x4, fixed_abs, tag = 'smem constant byte address 0x4 - core index']
  #allocation1 [shape = 'u32[144,128]{1,0:T(1,128)}', space=vmem, size = 0x12000, scoped, tag = 'internal scratch']
  %s0 = inlined_call_operand.hbm [shape: f32[2,8,32], index: 0, kind: input, shape index: {}]
  %s1 = inlined_call_operand.hbm [shape: f32[32,128], index: 1, kind: input, shape index: {}]
  %s2 = inlined_call_operand.hbm [shape: f32[32,128], index: 2, kind: input, shape index: {}]
  %s3 = inlined_call_operand.vmem [shape: f32[1,128], index: 3, kind: input, shape index: {}]
  %s4 = inlined_call_operand.hbm [shape: f32[32,128], index: 4, kind: input, shape index: {}]
  %s5 = inlined_call_operand.hbm [shape: f32[32,128], index: 5, kind: input, shape index: {}]
  %s6 = inlined_call_operand.vmem [shape: f32[1,128], index: 6, kind: input, shape index: {}]
  %s7 = inlined_call_operand.hbm [shape: f32[32,32], index: 7, kind: input, shape index: {}]
  %s8 = inlined_call_operand.vmem [shape: f32[1,32], index: 8, kind: input, shape index: {}]
  %s9 = inlined_call_operand.hbm [shape: f32[2,8,32], index: 9, kind: output, shape index: {}]
  %s10 = sld [smem:[#allocation0]]
  $region70: #{lstm_module_forward_pallas.1} parent=0
    _
  %s12 = ssub.s32 1, %s10
  %s13 = scalar_select 0, %s12, %s10
  $region1: #{lstm_module_forward_pallas.1} parent=0
    #allocation2 [shape = 'u8[8192]{0}', space=vmem, size = 0x2000, scoped, tag = 'input window, operand 0, single buffered']
    #allocation3 [shape = 's32[1]{0}', space=sflag, size = 0x4, scoped, tag = 'scoped memory for lstm_module_forward_pallas.1']
    #allocation4 [shape = 's32[1]{0}', space=sflag, size = 0x4, scoped, tag = 'scoped memory for lstm_module_forward_pallas.1']
    #allocation5 [shape = 'u8[16384]{0}', space=vmem, size = 0x4000, scoped, tag = 'input window, operand 1, single buffered']
    #allocation6 [shape = 's32[1]{0}', space=sflag, size = 0x4, scoped, tag = 'scoped memory for lstm_module_forward_pallas.1']
    #allocation7 [shape = 'u8[16384]{0}', space=vmem, size = 0x4000, scoped, tag = 'input window, operand 2, single buffered']
    #allocation8 [shape = 'u8[16384]{0}', space=vmem, size = 0x4000, scoped, tag = 'input window, operand 4, single buffered']
    #allocation9 [shape = 's32[1]{0}', space=sflag, size = 0x4, scoped, tag = 'scoped memory for lstm_module_forward_pallas.1']
    #allocation10 [shape = 'u8[16384]{0}', space=vmem, size = 0x4000, scoped, tag = 'input window, operand 5, single buffered']
    #allocation11 [shape = 'u8[16384]{0}', space=vmem, size = 0x4000, scoped, tag = 'input window, operand 7, single buffered']
    #allocation12 [shape = 's32[1]{0}', space=sflag, size = 0x4, scoped, tag = 'scoped memory for lstm_module_forward_pallas.1']
    #allocation13 [shape = 'u8[8192]{0}', space=vmem, size = 0x2000, scoped, tag = 'output window, operand 0, single buffered']
    %14 = vsyncpa [#allocation3], 0
    %15 = vsyncpa [#allocation6], 0
    %16 = vsyncpa [#allocation9], 0
    %17 = vsyncpa [#allocation12], 0
    %18 = vsyncpa [#allocation4], 0
    // Predicated region
    $region2: #{lstm_module_forward_pallas.1} parent=1 // pred_check
      _
    $region3: #{lstm_module_forward_pallas.1} parent=1 // pred_check_branch
      %20 = sbr.rel (0) target = $region5
    $region4: #{lstm_module_forward_pallas.1} parent=1 // pred_region
      %s22 = ssub.s32 256, 256
      %23 = vsyncadd [#allocation3], %s22
      %s24 = sshll.u32 [#allocation2], 4
      %s25 = int_to_ptr.vmem [resolvable:$true] %s24
      %30 = dma.hbm_to_vmem [thread:$0]  %s0, 256, %s25, [#allocation3], 128, 128, 8
    $region5: #{lstm_module_forward_pallas.1} parent=1 // pred_fallthru
      _
    // Predicated region
    $region6: #{lstm_module_forward_pallas.1} parent=1 // pred_check
      _
    $region7: #{lstm_module_forward_pallas.1} parent=1 // pred_check_branch
      %32 = sbr.rel (0) target = $region9
    $region8: #{lstm_module_forward_pallas.1} parent=1 // pred_region
      %s34 = ssub.s32 512, 512
      %35 = vsyncadd [#allocation6], %s34
      %s36 = sshll.u32 [#allocation5], 4
      %s37 = int_to_ptr.vmem [resolvable:$true] %s36
      %42 = dma.hbm_to_vmem [thread:$0]  %s1, 512, %s37, [#allocation6], 128, 128, 8
    $region9: #{lstm_module_forward_pallas.1} parent=1 // pred_fallthru
      _
    // Predicated region
    $region10: #{lstm_module_forward_pallas.1} parent=1 // pred_check
      _
    $region11: #{lstm_module_forward_pallas.1} parent=1 // pred_check_branch
      %44 = sbr.rel (0) target = $region13
    $region12: #{lstm_module_forward_pallas.1} parent=1 // pred_region
      %s46 = ssub.s32 512, 512
      %47 = vsyncadd [#allocation6], %s46
      %s48 = sshll.u32 [#allocation7], 4
      %s49 = int_to_ptr.vmem [resolvable:$true] %s48
      %54 = dma.hbm_to_vmem [thread:$0]  %s2, 512, %s49, [#allocation6], 128, 128, 8
    $region13: #{lstm_module_forward_pallas.1} parent=1 // pred_fallthru
      _
    // Predicated region
    $region14: #{lstm_module_forward_pallas.1} parent=1 // pred_check
      _
    $region15: #{lstm_module_forward_pallas.1} parent=1 // pred_check_branch
      %56 = sbr.rel (0) target = $region17
    $region16: #{lstm_module_forward_pallas.1} parent=1 // pred_region
      _
    $region17: #{lstm_module_forward_pallas.1} parent=1 // pred_fallthru
      _
    // Predicated region
    $region18: #{lstm_module_forward_pallas.1} parent=1 // pred_check
      _
    $region19: #{lstm_module_forward_pallas.1} parent=1 // pred_check_branch
      %58 = sbr.rel (0) target = $region21
    $region20: #{lstm_module_forward_pallas.1} parent=1 // pred_region
      %s60 = ssub.s32 512, 512
      %61 = vsyncadd [#allocation9], %s60
      %s62 = sshll.u32 [#allocation8], 4
      %s63 = int_to_ptr.vmem [resolvable:$true] %s62
      %68 = dma.hbm_to_vmem [thread:$0]  %s4, 512, %s63, [#allocation9], 128, 128, 8
    $region21: #{lstm_module_forward_pallas.1} parent=1 // pred_fallthru
      _
    // Predicated region
    $region22: #{lstm_module_forward_pallas.1} parent=1 // pred_check
      _
    $region23: #{lstm_module_forward_pallas.1} parent=1 // pred_check_branch
      %70 = sbr.rel (0) target = $region25
    $region24: #{lstm_module_forward_pallas.1} parent=1 // pred_region
      %s72 = ssub.s32 512, 512
      %73 = vsyncadd [#allocation9], %s72
      %s74 = sshll.u32 [#allocation10], 4
      %s75 = int_to_ptr.vmem [resolvable:$true] %s74
      %80 = dma.hbm_to_vmem [thread:$0]  %s5, 512, %s75, [#allocation9], 128, 128, 8
    $region25: #{lstm_module_forward_pallas.1} parent=1 // pred_fallthru
      _
    // Predicated region
    $region26: #{lstm_module_forward_pallas.1} parent=1 // pred_check
      _
    $region27: #{lstm_module_forward_pallas.1} parent=1 // pred_check_branch
      %82 = sbr.rel (0) target = $region29
    $region28: #{lstm_module_forward_pallas.1} parent=1 // pred_region
      _
    $region29: #{lstm_module_forward_pallas.1} parent=1 // pred_fallthru
      _
    // Predicated region
    $region30: #{lstm_module_forward_pallas.1} parent=1 // pred_check
      _
    $region31: #{lstm_module_forward_pallas.1} parent=1 // pred_check_branch
      %84 = sbr.rel (0) target = $region33
    $region32: #{lstm_module_forward_pallas.1} parent=1 // pred_region
      %s86 = ssub.s32 512, 512
      %87 = vsyncadd [#allocation12], %s86
      %s88 = sshll.u32 [#allocation11], 4
      %s89 = int_to_ptr.vmem [resolvable:$true] %s88
      %94 = dma.hbm_to_vmem [thread:$0]  %s7, 512, %s89, [#allocation12], 128, 128, 8
    $region33: #{lstm_module_forward_pallas.1} parent=1 // pred_fallthru
      _
    // Predicated region
    $region34: #{lstm_module_forward_pallas.1} parent=1 // pred_check
      _
    $region35: #{lstm_module_forward_pallas.1} parent=1 // pred_check_branch
      %96 = sbr.rel (0) target = $region37
    $region36: #{lstm_module_forward_pallas.1} parent=1 // pred_region
      _
    $region37: #{lstm_module_forward_pallas.1} parent=1 // pred_fallthru
      _
    // Predicated region
    $region38: #{lstm_module_forward_pallas.1} parent=1 // pred_check
      _
    $region39: #{lstm_module_forward_pallas.1} parent=1 // pred_check_branch
      %98 = sbr.rel (0) target = $region41
    $region40: #{lstm_module_forward_pallas.1} parent=1 // pred_region
      %99 = dma.done [#allocation3], 256
    $region41: #{lstm_module_forward_pallas.1} parent=1 // pred_fallthru
      _
    // Predicated region
    $region42: #{lstm_module_forward_pallas.1} parent=1 // pred_check
      _
    $region43: #{lstm_module_forward_pallas.1} parent=1 // pred_check_branch
      %101 = sbr.rel (0) target = $region45
    $region44: #{lstm_module_forward_pallas.1} parent=1 // pred_region
      %102 = dma.done [#allocation6], 512
    $region45: #{lstm_module_forward_pallas.1} parent=1 // pred_fallthru
      _
    // Predicated region
    $region46: #{lstm_module_forward_pallas.1} parent=1 // pred_check
      _
    $region47: #{lstm_module_forward_pallas.1} parent=1 // pred_check_branch
      %104 = sbr.rel (0) target = $region49
    $region48: #{lstm_module_forward_pallas.1} parent=1 // pred_region
      %105 = dma.done [#allocation6], 512
    $region49: #{lstm_module_forward_pallas.1} parent=1 // pred_fallthru
      _
    // Predicated region
    $region50: #{lstm_module_forward_pallas.1} parent=1 // pred_check
      _
    $region51: #{lstm_module_forward_pallas.1} parent=1 // pred_check_branch
      %107 = sbr.rel (0) target = $region53
    $region52: #{lstm_module_forward_pallas.1} parent=1 // pred_region
      %108 = dma.done [#allocation9], 512
    $region53: #{lstm_module_forward_pallas.1} parent=1 // pred_fallthru
      _
    // Predicated region
    $region54: #{lstm_module_forward_pallas.1} parent=1 // pred_check
      _
    $region55: #{lstm_module_forward_pallas.1} parent=1 // pred_check_branch
      %110 = sbr.rel (0) target = $region57
    $region56: #{lstm_module_forward_pallas.1} parent=1 // pred_region
      %111 = dma.done [#allocation9], 512
    $region57: #{lstm_module_forward_pallas.1} parent=1 // pred_fallthru
      _
    // Predicated region
    $region58: #{lstm_module_forward_pallas.1} parent=1 // pred_check
      _
    $region59: #{lstm_module_forward_pallas.1} parent=1 // pred_check_branch
      %113 = sbr.rel (0) target = $region61
    $region60: #{lstm_module_forward_pallas.1} parent=1 // pred_region
      %114 = dma.done [#allocation12], 512
    $region61: #{lstm_module_forward_pallas.1} parent=1 // pred_fallthru
      _
    %v115 = vld [vmem:[#allocation2] sm:$0xff]
    %v116 = vld [vmem:[#allocation2 + $0x8] sm:$0xff]
    %v117 = vld [vmem:[#allocation5] sm:$0xff]
    %v118 = vld [vmem:[#allocation5 + $0x8] sm:$0xff]
    %v119 = vld [vmem:[#allocation5 + $0x10] sm:$0xff]
    %v120 = vld [vmem:[#allocation5 + $0x18] sm:$0xff]
    %v121 = vld [vmem:[#allocation7] sm:$0xff]
    %v122 = vld [vmem:[#allocation7 + $0x8] sm:$0xff]
    %v123 = vld [vmem:[#allocation7 + $0x10] sm:$0xff]
    %v124 = vld [vmem:[#allocation7 + $0x18] sm:$0xff]
    %v125 = vld [vmem:[%s3] sm:$0x1]
    %v127 = vlaneseq
    %v128 = vshrl.u32 %v127, 7
    %v129 = vsub.s32 0, %v128
    %v130 = vrot.slane %v125, %v129
    %vm132 = vcmask 261120
    %v134 = vsel %vm132, %v115, 0
    %v137 = vsel %vm132, %v116, 0
    %139 = vmatprep.subr.mxu0 0.0
    %140 = vmatpush1.msra.mxu0 %v117
    %141 = vmatprep.subr.mxu0 0.0
    %142 = vmatpush1.msra.mxu0 %v118
    %143 = vmatprep.subr.mxu0 0.0
    %144 = vmatpush1.msra.mxu0 %v119
    %145 = vmatprep.subr.mxu0 0.0
    %146 = vmatpush1.msra.mxu0 %v120
    %147 = vmatprep.subr.mxu0 0.0
    %148 = vmatpush1.msra.mxu0 0.0
    %149 = vmatprep.subr.mxu0 0.0
    %150 = vmatpush1.msra.mxu0 0.0
    %151 = vmatprep.subr.mxu0 0.0
    %152 = vmatpush1.msra.mxu0 0.0
    %153 = vmatprep.subr.mxu0 0.0
    %154 = vmatpush1.msra.mxu0 0.0
    %155 = vmatprep.subr.mxu0 0.0
    %156 = vmatpush1.msra.mxu0 0.0
    %157 = vmatprep.subr.mxu0 0.0
    %158 = vmatpush1.msra.mxu0 0.0
    %159 = vmatprep.subr.mxu0 0.0
    %160 = vmatpush1.msra.mxu0 0.0
    %161 = vmatprep.subr.mxu0 0.0
    %162 = vmatpush1.msra.mxu0 0.0
    %163 = vmatprep.subr.mxu0 0.0
    %164 = vmatpush1.msra.mxu0 0.0
    %165 = vmatprep.subr.mxu0 0.0
    %166 = vmatpush1.msra.mxu0 0.0
    %167 = vmatprep.subr.mxu0 0.0
    %168 = vmatpush1.msra.mxu0 0.0
    %169 = vmatprep.subr.mxu0 0.0
    %170 = vmatpush1.msra.mxu0 0.0
    %171 = vmatprep.subr.mxu0 0.0
    %172 = vmatpush1.msra.mxu0 0.0
    %173 = vmatprep.subr.mxu0 0.0
    %174 = vmatpush1.msra.mxu0 0.0
    %175 = vmatprep.subr.mxu0 0.0
    %176 = vmatpush1.msra.mxu0 0.0
    %177 = vmatprep.subr.mxu0 0.0
    %178 = vmatpush1.msra.mxu0 0.0
    %179 = vmatprep.subr.mxu0 0.0
    %180 = vmatpush1.msra.mxu0 0.0
    %181 = vmatprep.subr.mxu0 0.0
    %182 = vmatpush1.msra.mxu0 0.0
    %183 = vmatprep.subr.mxu0 0.0
    %184 = vmatpush1.msra.mxu0 0.0
    %185 = vmatprep.subr.mxu0 0.0
    %186 = vmatpush1.msra.mxu0 0.0
    %187 = vmatprep.subr.mxu0 0.0
    %188 = vmatpush1.msra.mxu0 0.0
    %189 = vmatprep.subr.mxu0 0.0
    %190 = vmatpush1.msra.mxu0 0.0
    %191 = vmatprep.subr.mxu0 0.0
    %192 = vmatpush1.msra.mxu0 0.0
    %193 = vmatprep.subr.mxu0 0.0
    %194 = vmatpush1.msra.mxu0 0.0
    %195 = vmatprep.subr.mxu0 0.0
    %196 = vmatpush1.msra.mxu0 0.0
    %197 = vmatprep.subr.mxu0 0.0
    %198 = vmatpush1.msra.mxu0 0.0
    %199 = vmatprep.subr.mxu0 0.0
    %200 = vmatpush1.msra.mxu0 0.0
    %201 = vmatprep.subr.mxu0 0.0
    %202 = vmatpush1.msra.mxu0 0.0
    %203 = vmatprep.mubr.f32.mxu0 0.0
    %204 = vmatmul.mubr.f32.gmra.mrb[0].mxu0 %v134
    %v205 = vpop.f32.mrb[0].mxu0
    %v206 = vadd.f32 %v130, %v205
    %v207 = vpop.f32.mrb[0].mxu0
    %208 = vmatprep.mubr.f32.mxu0 0.0
    %209 = vmatmul.mubr.f32.gmra.mrb[0].mxu0 %v137
    %v210 = vpop.f32.mrb[0].mxu0
    %v211 = vadd.f32 %v130, %v210
    %v212 = vpop.f32.mrb[0].mxu0
    %213 = vdwg.mxu0
    %v215 = vsel %vm132, 0.0, 0
    %217 = vmatprep.subr.mxu0 0.0
    %218 = vmatpush1.msra.mxu0 %v121
    %219 = vmatprep.subr.mxu0 0.0
    %220 = vmatpush1.msra.mxu0 %v122
    %221 = vmatprep.subr.mxu0 0.0
    %222 = vmatpush1.msra.mxu0 %v123
    %223 = vmatprep.subr.mxu0 0.0
    %224 = vmatpush1.msra.mxu0 %v124
    %225 = vmatprep.subr.mxu0 0.0
    %226 = vmatpush1.msra.mxu0 0.0
    %227 = vmatprep.subr.mxu0 0.0
    %228 = vmatpush1.msra.mxu0 0.0
    %229 = vmatprep.subr.mxu0 0.0
    %230 = vmatpush1.msra.mxu0 0.0
    %231 = vmatprep.subr.mxu0 0.0
    %232 = vmatpush1.msra.mxu0 0.0
    %233 = vmatprep.subr.mxu0 0.0
    %234 = vmatpush1.msra.mxu0 0.0
    %235 = vmatprep.subr.mxu0 0.0
    %236 = vmatpush1.msra.mxu0 0.0
    %237 = vmatprep.subr.mxu0 0.0
    %238 = vmatpush1.msra.mxu0 0.0
    %239 = vmatprep.subr.mxu0 0.0
    %240 = vmatpush1.msra.mxu0 0.0
    %241 = vmatprep.subr.mxu0 0.0
    %242 = vmatpush1.msra.mxu0 0.0
    %243 = vmatprep.subr.mxu0 0.0
    %244 = vmatpush1.msra.mxu0 0.0
    %245 = vmatprep.subr.mxu0 0.0
    %246 = vmatpush1.msra.mxu0 0.0
    %247 = vmatprep.subr.mxu0 0.0
    %248 = vmatpush1.msra.mxu0 0.0
    %249 = vmatprep.subr.mxu0 0.0
    %250 = vmatpush1.msra.mxu0 0.0
    %251 = vmatprep.subr.mxu0 0.0
    %252 = vmatpush1.msra.mxu0 0.0
    %253 = vmatprep.subr.mxu0 0.0
    %254 = vmatpush1.msra.mxu0 0.0
    %255 = vmatprep.subr.mxu0 0.0
    %256 = vmatpush1.msra.mxu0 0.0
    %257 = vmatprep.subr.mxu0 0.0
    %258 = vmatpush1.msra.mxu0 0.0
    %259 = vmatprep.subr.mxu0 0.0
    %260 = vmatpush1.msra.mxu0 0.0
    %261 = vmatprep.subr.mxu0 0.0
    %262 = vmatpush1.msra.mxu0 0.0
    %263 = vmatprep.subr.mxu0 0.0
    %264 = vmatpush1.msra.mxu0 0.0
    %265 = vmatprep.subr.mxu0 0.0
    %266 = vmatpush1.msra.mxu0 0.0
    %267 = vmatprep.subr.mxu0 0.0
    %268 = vmatpush1.msra.mxu0 0.0
    %269 = vmatprep.subr.mxu0 0.0
    %270 = vmatpush1.msra.mxu0 0.0
    %271 = vmatprep.subr.mxu0 0.0
    %272 = vmatpush1.msra.mxu0 0.0
    %273 = vmatprep.subr.mxu0 0.0
    %274 = vmatpush1.msra.mxu0 0.0
    %275 = vmatprep.subr.mxu0 0.0
    %276 = vmatpush1.msra.mxu0 0.0
    %277 = vmatprep.subr.mxu0 0.0
    %278 = vmatpush1.msra.mxu0 0.0
    %279 = vmatprep.subr.mxu0 0.0
    %280 = vmatpush1.msra.mxu0 0.0
    %281 = vmatprep.mubr.f32.mxu0 0.0
    %282 = vmatmul.mubr.f32.gmra.mrb[0].mxu0 %v215
    %v283 = vpop.f32.mrb[0].mxu0
    %v284 = vadd.f32 0.0, %v283
    %v285 = vpop.f32.mrb[0].mxu0
    %286 = vdwg.mxu0
    %v288 = vrot.slane %v284, 1
    %v291 = vadd.f32 %v206, %v284
    %v292 = vadd.f32 %v211, %v288
    %v293 = vxor.u32 %v291, 2147483648
    %v294 = vxor.u32 %v292, 2147483648
    %v295 = vmul.f32 %v293, 1.442695
    %v296 = vpow.pop %v295
    %v297 = vmul.f32 %v294, 1.442695
    %v298 = vpow.pop %v297
    %v299 = vadd.f32 %v296, 1.0
    %v300 = vadd.f32 %v298, 1.0
    %v301 = vrcp.pop %v299
    %v302 = vmul.f32 1.0, %v301
    %v303 = vrcp.pop %v300
    %v304 = vmul.f32 1.0, %v303
    %v305 = vtanh.pop %v291
    %v306 = vtanh.pop %v292
    %v307 = vmul.f32 %v302, 0.0
    %v308 = vmul.f32 %v304, 0.0
    %311 = vrot.lane.b32.xlu0 %v305, 32
    %v312 = vpop.permute.xlu0 %311
    %313 = vrot.lane.b32.xlu0 %v306, 32
    %v314 = vpop.permute.xlu0 %313
    %v317 = vmul.f32 %v302, %v312
    %v318 = vmul.f32 %v304, %v314
    %321 = vrot.lane.b32.xlu0 %v317, 32
    %v322 = vpop.permute.xlu0 %321
    %323 = vrot.lane.b32.xlu0 %v318, 32
    %v324 = vpop.permute.xlu0 %323
    %v327 = vadd.f32 %v307, %v322
    %v328 = vadd.f32 %v308, %v324
    %v329 = vtanh.pop %v327
    %v330 = vtanh.pop %v328
    %333 = vrot.lane.b32.xlu0 %v329, 32
    %v334 = vpop.permute.xlu0 %333
    %335 = vrot.lane.b32.xlu0 %v330, 32
    %v336 = vpop.permute.xlu0 %335
    %v339 = vmul.f32 %v302, %v334
    %v340 = vmul.f32 %v304, %v336
    %v343 = vrot.slane %v340, 7
    %vm344 = vcmask 1041409
    %v345 = vsel %vm344, %v343, %v339
    %346 = vrot.lane.b32.xlu0 %v345, 64
    %v347 = vpop.permute.xlu0 %346
    %v348 = vsel %vm132, %v347, 0
    %350 = vmatprep.subr.mxu0 0.0
    %351 = vmatpush1.msra.mxu0 %v121
    %352 = vmatprep.subr.mxu0 0.0
    %353 = vmatpush1.msra.mxu0 %v122
    %354 = vmatprep.subr.mxu0 0.0
    %355 = vmatpush1.msra.mxu0 %v123
    %356 = vmatprep.subr.mxu0 0.0
    %357 = vmatpush1.msra.mxu0 %v124
    %358 = vmatprep.subr.mxu0 0.0
    %359 = vmatpush1.msra.mxu0 0.0
    %360 = vmatprep.subr.mxu0 0.0
    %361 = vmatpush1.msra.mxu0 0.0
    %362 = vmatprep.subr.mxu0 0.0
    %363 = vmatpush1.msra.mxu0 0.0
    %364 = vmatprep.subr.mxu0 0.0
    %365 = vmatpush1.msra.mxu0 0.0
    %366 = vmatprep.subr.mxu0 0.0
    %367 = vmatpush1.msra.mxu0 0.0
    %368 = vmatprep.subr.mxu0 0.0
    %369 = vmatpush1.msra.mxu0 0.0
    %370 = vmatprep.subr.mxu0 0.0
    %371 = vmatpush1.msra.mxu0 0.0
    %372 = vmatprep.subr.mxu0 0.0
    %373 = vmatpush1.msra.mxu0 0.0
    %374 = vmatprep.subr.mxu0 0.0
    %375 = vmatpush1.msra.mxu0 0.0
    %376 = vmatprep.subr.mxu0 0.0
    %377 = vmatpush1.msra.mxu0 0.0
    %378 = vmatprep.subr.mxu0 0.0
    %379 = vmatpush1.msra.mxu0 0.0
    %380 = vmatprep.subr.mxu0 0.0
    %381 = vmatpush1.msra.mxu0 0.0
    %382 = vmatprep.subr.mxu0 0.0
    %383 = vmatpush1.msra.mxu0 0.0
    %384 = vmatprep.subr.mxu0 0.0
    %385 = vmatpush1.msra.mxu0 0.0
    %386 = vmatprep.subr.mxu0 0.0
    %387 = vmatpush1.msra.mxu0 0.0
    %388 = vmatprep.subr.mxu0 0.0
    %389 = vmatpush1.msra.mxu0 0.0
    %390 = vmatprep.subr.mxu0 0.0
    %391 = vmatpush1.msra.mxu0 0.0
    %392 = vmatprep.subr.mxu0 0.0
    %393 = vmatpush1.msra.mxu0 0.0
    %394 = vmatprep.subr.mxu0 0.0
    %395 = vmatpush1.msra.mxu0 0.0
    %396 = vmatprep.subr.mxu0 0.0
    %397 = vmatpush1.msra.mxu0 0.0
    %398 = vmatprep.subr.mxu0 0.0
    %399 = vmatpush1.msra.mxu0 0.0
    %400 = vmatprep.subr.mxu0 0.0
    %401 = vmatpush1.msra.mxu0 0.0
    %402 = vmatprep.subr.mxu0 0.0
    %403 = vmatpush1.msra.mxu0 0.0
    %404 = vmatprep.subr.mxu0 0.0
    %405 = vmatpush1.msra.mxu0 0.0
    %406 = vmatprep.subr.mxu0 0.0
    %407 = vmatpush1.msra.mxu0 0.0
    %408 = vmatprep.subr.mxu0 0.0
    %409 = vmatpush1.msra.mxu0 0.0
    %410 = vmatprep.subr.mxu0 0.0
    %411 = vmatpush1.msra.mxu0 0.0
    %412 = vmatprep.subr.mxu0 0.0
    %413 = vmatpush1.msra.mxu0 0.0
    %414 = vmatprep.mubr.f32.mxu0 0.0
    %415 = vmatmul.mubr.f32.gmra.mrb[0].mxu0 %v348
    %v416 = vpop.f32.mrb[0].mxu0
    %v417 = vadd.f32 0.0, %v416
    %v418 = vpop.f32.mrb[0].mxu0
    %419 = vdwg.mxu0
    %v421 = vrot.slane %v417, 7
    %v424 = vadd.f32 %v206, %v421
    %v425 = vadd.f32 %v211, %v417
    %v426 = vxor.u32 %v424, 2147483648
    %v427 = vxor.u32 %v425, 2147483648
    %v428 = vmul.f32 %v426, 1.442695
    %v429 = vpow.pop %v428
    %v430 = vmul.f32 %v427, 1.442695
    %v431 = vpow.pop %v430
    %v432 = vadd.f32 %v429, 1.0
    %v433 = vadd.f32 %v431, 1.0
    %v434 = vrcp.pop %v432
    %v435 = vmul.f32 1.0, %v434
    %v436 = vrcp.pop %v433
    %v437 = vmul.f32 1.0, %v436
    %v438 = vtanh.pop %v424
    %v439 = vtanh.pop %v425
    %v442 = vrot.slane %v327, 7
    %v443 = vrot.slane %v328, 7
    %v446 = vmul.f32 %v435, %v442
    %v447 = vmul.f32 %v437, %v443
    %450 = vrot.lane.b32.xlu0 %v438, 32
    %v451 = vpop.permute.xlu0 %450
    %452 = vrot.lane.b32.xlu0 %v439, 32
    %v453 = vpop.permute.xlu0 %452
    %v456 = vmul.f32 %v435, %v451
    %v457 = vmul.f32 %v437, %v453
    %460 = vrot.lane.b32.xlu0 %v456, 32
    %v461 = vpop.permute.xlu0 %460
    %462 = vrot.lane.b32.xlu0 %v457, 32
    %v463 = vpop.permute.xlu0 %462
    %v466 = vadd.f32 %v446, %v461
    %v467 = vadd.f32 %v447, %v463
    %v468 = vtanh.pop %v466
    %v469 = vtanh.pop %v467
    %472 = vrot.lane.b32.xlu0 %v468, 32
    %v473 = vpop.permute.xlu0 %472
    %474 = vrot.lane.b32.xlu0 %v469, 32
    %v475 = vpop.permute.xlu0 %474
    %v478 = vmul.f32 %v435, %v473
    %v479 = vmul.f32 %v437, %v475
    %v482 = vrot.slane %v478, 1
    %v483 = vsel %vm344, %v479, %v482
    %484 = vrot.lane.b32.xlu0 %v483, 64
    %v485 = vpop.permute.xlu0 %484
    %v486 = vsel %vm132, %v485, 0
    %488 = vmatprep.subr.mxu0 0.0
    %489 = vmatpush1.msra.mxu0 %v121
    %490 = vmatprep.subr.mxu0 0.0
    %491 = vmatpush1.msra.mxu0 %v122
    %492 = vmatprep.subr.mxu0 0.0
    %493 = vmatpush1.msra.mxu0 %v123
    %494 = vmatprep.subr.mxu0 0.0
    %495 = vmatpush1.msra.mxu0 %v124
    %496 = vmatprep.subr.mxu0 0.0
    %497 = vmatpush1.msra.mxu0 0.0
    %498 = vmatprep.subr.mxu0 0.0
    %499 = vmatpush1.msra.mxu0 0.0
    %500 = vmatprep.subr.mxu0 0.0
    %501 = vmatpush1.msra.mxu0 0.0
    %502 = vmatprep.subr.mxu0 0.0
    %503 = vmatpush1.msra.mxu0 0.0
    %504 = vmatprep.subr.mxu0 0.0
    %505 = vmatpush1.msra.mxu0 0.0
    %506 = vmatprep.subr.mxu0 0.0
    %507 = vmatpush1.msra.mxu0 0.0
    %508 = vmatprep.subr.mxu0 0.0
    %509 = vmatpush1.msra.mxu0 0.0
    %510 = vmatprep.subr.mxu0 0.0
    %511 = vmatpush1.msra.mxu0 0.0
    %512 = vmatprep.subr.mxu0 0.0
    %513 = vmatpush1.msra.mxu0 0.0
    %514 = vmatprep.subr.mxu0 0.0
    %515 = vmatpush1.msra.mxu0 0.0
    %516 = vmatprep.subr.mxu0 0.0
    %517 = vmatpush1.msra.mxu0 0.0
    %518 = vmatprep.subr.mxu0 0.0
    %519 = vmatpush1.msra.mxu0 0.0
    %520 = vmatprep.subr.mxu0 0.0
    %521 = vmatpush1.msra.mxu0 0.0
    %522 = vmatprep.subr.mxu0 0.0
    %523 = vmatpush1.msra.mxu0 0.0
    %524 = vmatprep.subr.mxu0 0.0
    %525 = vmatpush1.msra.mxu0 0.0
    %526 = vmatprep.subr.mxu0 0.0
    %527 = vmatpush1.msra.mxu0 0.0
    %528 = vmatprep.subr.mxu0 0.0
    %529 = vmatpush1.msra.mxu0 0.0
    %530 = vmatprep.subr.mxu0 0.0
    %531 = vmatpush1.msra.mxu0 0.0
    %532 = vmatprep.subr.mxu0 0.0
    %533 = vmatpush1.msra.mxu0 0.0
    %534 = vmatprep.subr.mxu0 0.0
    %535 = vmatpush1.msra.mxu0 0.0
    %536 = vmatprep.subr.mxu0 0.0
    %537 = vmatpush1.msra.mxu0 0.0
    %538 = vmatprep.subr.mxu0 0.0
    %539 = vmatpush1.msra.mxu0 0.0
    %540 = vmatprep.subr.mxu0 0.0
    %541 = vmatpush1.msra.mxu0 0.0
    %542 = vmatprep.subr.mxu0 0.0
    %543 = vmatpush1.msra.mxu0 0.0
    %544 = vmatprep.subr.mxu0 0.0
    %545 = vmatpush1.msra.mxu0 0.0
    %546 = vmatprep.subr.mxu0 0.0
    %547 = vmatpush1.msra.mxu0 0.0
    %548 = vmatprep.subr.mxu0 0.0
    %549 = vmatpush1.msra.mxu0 0.0
    %550 = vmatprep.subr.mxu0 0.0
    %551 = vmatpush1.msra.mxu0 0.0
    %552 = vmatprep.mubr.f32.mxu0 0.0
    %553 = vmatmul.mubr.f32.gmra.mrb[0].mxu0 %v486
    %v554 = vpop.f32.mrb[0].mxu0
    %v555 = vadd.f32 0.0, %v554
    %v556 = vpop.f32.mrb[0].mxu0
    %557 = vdwg.mxu0
    %v559 = vrot.slane %v555, 6
    %v560 = vrot.slane %v555, 7
    %v563 = vadd.f32 %v206, %v559
    %v564 = vadd.f32 %v211, %v560
    %v565 = vxor.u32 %v563, 2147483648
    %v566 = vxor.u32 %v564, 2147483648
    %v567 = vmul.f32 %v565, 1.442695
    %v568 = vpow.pop %v567
    %v569 = vmul.f32 %v566, 1.442695
    %v570 = vpow.pop %v569
    %v571 = vadd.f32 %v568, 1.0
    %v572 = vadd.f32 %v570, 1.0
    %v573 = vrcp.pop %v571
    %v574 = vmul.f32 1.0, %v573
    %v575 = vrcp.pop %v572
    %v576 = vmul.f32 1.0, %v575
    %v577 = vtanh.pop %v563
    %v578 = vtanh.pop %v564
    %v581 = vrot.slane %v466, 7
    %v582 = vrot.slane %v467, 7
    %v585 = vmul.f32 %v574, %v581
    %v586 = vmul.f32 %v576, %v582
    %589 = vrot.lane.b32.xlu0 %v577, 32
    %v590 = vpop.permute.xlu0 %589
    %591 = vrot.lane.b32.xlu0 %v578, 32
    %v592 = vpop.permute.xlu0 %591
    %v595 = vmul.f32 %v574, %v590
    %v596 = vmul.f32 %v576, %v592
    %599 = vrot.lane.b32.xlu0 %v595, 32
    %v600 = vpop.permute.xlu0 %599
    %601 = vrot.lane.b32.xlu0 %v596, 32
    %v602 = vpop.permute.xlu0 %601
    %v605 = vadd.f32 %v585, %v600
    %v606 = vadd.f32 %v586, %v602
    %v607 = vtanh.pop %v605
    %v608 = vtanh.pop %v606
    %611 = vrot.lane.b32.xlu0 %v607, 32
    %v612 = vpop.permute.xlu0 %611
    %613 = vrot.lane.b32.xlu0 %v608, 32
    %v614 = vpop.permute.xlu0 %613
    %v617 = vmul.f32 %v574, %v612
    %v618 = vmul.f32 %v576, %v614
    %v621 = vrot.slane %v617, 2
    %v622 = vrot.slane %v618, 1
    %v623 = vsel %vm344, %v622, %v621
    %624 = vrot.lane.b32.xlu0 %v623, 64
    %v625 = vpop.permute.xlu0 %624
    %v626 = vsel %vm132, %v625, 0
    %628 = vmatprep.subr.mxu0 0.0
    %629 = vmatpush1.msra.mxu0 %v121
    %630 = vmatprep.subr.mxu0 0.0
    %631 = vmatpush1.msra.mxu0 %v122
    %632 = vmatprep.subr.mxu0 0.0
    %633 = vmatpush1.msra.mxu0 %v123
    %634 = vmatprep.subr.mxu0 0.0
    %635 = vmatpush1.msra.mxu0 %v124
    %636 = vmatprep.subr.mxu0 0.0
    %637 = vmatpush1.msra.mxu0 0.0
    %638 = vmatprep.subr.mxu0 0.0
    %639 = vmatpush1.msra.mxu0 0.0
    %640 = vmatprep.subr.mxu0 0.0
    %641 = vmatpush1.msra.mxu0 0.0
    %642 = vmatprep.subr.mxu0 0.0
    %643 = vmatpush1.msra.mxu0 0.0
    %644 = vmatprep.subr.mxu0 0.0
    %645 = vmatpush1.msra.mxu0 0.0
    %646 = vmatprep.subr.mxu0 0.0
    %647 = vmatpush1.msra.mxu0 0.0
    %648 = vmatprep.subr.mxu0 0.0
    %649 = vmatpush1.msra.mxu0 0.0
    %650 = vmatprep.subr.mxu0 0.0
    %651 = vmatpush1.msra.mxu0 0.0
    %652 = vmatprep.subr.mxu0 0.0
    %653 = vmatpush1.msra.mxu0 0.0
    %654 = vmatprep.subr.mxu0 0.0
    %655 = vmatpush1.msra.mxu0 0.0
    %656 = vmatprep.subr.mxu0 0.0
    %657 = vmatpush1.msra.mxu0 0.0
    %658 = vmatprep.subr.mxu0 0.0
    %659 = vmatpush1.msra.mxu0 0.0
    %660 = vmatprep.subr.mxu0 0.0
    %661 = vmatpush1.msra.mxu0 0.0
    %662 = vmatprep.subr.mxu0 0.0
    %663 = vmatpush1.msra.mxu0 0.0
    %664 = vmatprep.subr.mxu0 0.0
    %665 = vmatpush1.msra.mxu0 0.0
    %666 = vmatprep.subr.mxu0 0.0
    %667 = vmatpush1.msra.mxu0 0.0
    %668 = vmatprep.subr.mxu0 0.0
    %669 = vmatpush1.msra.mxu0 0.0
    %670 = vmatprep.subr.mxu0 0.0
    %671 = vmatpush1.msra.mxu0 0.0
    %672 = vmatprep.subr.mxu0 0.0
    %673 = vmatpush1.msra.mxu0 0.0
    %674 = vmatprep.subr.mxu0 0.0
    %675 = vmatpush1.msra.mxu0 0.0
    %676 = vmatprep.subr.mxu0 0.0
    %677 = vmatpush1.msra.mxu0 0.0
    %678 = vmatprep.subr.mxu0 0.0
    %679 = vmatpush1.msra.mxu0 0.0
    %680 = vmatprep.subr.mxu0 0.0
    %681 = vmatpush1.msra.mxu0 0.0
    %682 = vmatprep.subr.mxu0 0.0
    %683 = vmatpush1.msra.mxu0 0.0
    %684 = vmatprep.subr.mxu0 0.0
    %685 = vmatpush1.msra.mxu0 0.0
    %686 = vmatprep.subr.mxu0 0.0
    %687 = vmatpush1.msra.mxu0 0.0
    %688 = vmatprep.subr.mxu0 0.0
    %689 = vmatpush1.msra.mxu0 0.0
    %690 = vmatprep.subr.mxu0 0.0
    %691 = vmatpush1.msra.mxu0 0.0
    %692 = vmatprep.mubr.f32.mxu0 0.0
    %693 = vmatmul.mubr.f32.gmra.mrb[0].mxu0 %v626
    %v694 = vpop.f32.mrb[0].mxu0
    %v695 = vadd.f32 0.0, %v694
    %v696 = vpop.f32.mrb[0].mxu0
    %697 = vdwg.mxu0
    %v699 = vrot.slane %v695, 5
    %v700 = vrot.slane %v695, 6
    %v703 = vadd.f32 %v206, %v699
    %v704 = vadd.f32 %v211, %v700
    %v705 = vxor.u32 %v703, 2147483648
    %v706 = vxor.u32 %v704, 2147483648
    %v707 = vmul.f32 %v705, 1.442695
    %v708 = vpow.pop %v707
    %v709 = vmul.f32 %v706, 1.442695
    %v710 = vpow.pop %v709
    %v711 = vadd.f32 %v708, 1.0
    %v712 = vadd.f32 %v710, 1.0
    %v713 = vrcp.pop %v711
    %v714 = vmul.f32 1.0, %v713
    %v715 = vrcp.pop %v712
    %v716 = vmul.f32 1.0, %v715
    %v717 = vtanh.pop %v703
    %v718 = vtanh.pop %v704
    %v721 = vrot.slane %v605, 7
    %v722 = vrot.slane %v606, 7
    %v725 = vmul.f32 %v714, %v721
    %v726 = vmul.f32 %v716, %v722
    %729 = vrot.lane.b32.xlu0 %v717, 32
    %v730 = vpop.permute.xlu0 %729
    %731 = vrot.lane.b32.xlu0 %v718, 32
    %v732 = vpop.permute.xlu0 %731
    %v735 = vmul.f32 %v714, %v730
    %v736 = vmul.f32 %v716, %v732
    %739 = vrot.lane.b32.xlu0 %v735, 32
    %v740 = vpop.permute.xlu0 %739
    %741 = vrot.lane.b32.xlu0 %v736, 32
    %v742 = vpop.permute.xlu0 %741
    %v745 = vadd.f32 %v725, %v740
    %v746 = vadd.f32 %v726, %v742
    %v747 = vtanh.pop %v745
    %v748 = vtanh.pop %v746
    %751 = vrot.lane.b32.xlu0 %v747, 32
    %v752 = vpop.permute.xlu0 %751
    %753 = vrot.lane.b32.xlu0 %v748, 32
    %v754 = vpop.permute.xlu0 %753
    %v757 = vmul.f32 %v714, %v752
    %v758 = vmul.f32 %v716, %v754
    %v761 = vrot.slane %v757, 3
    %v762 = vrot.slane %v758, 2
    %v763 = vsel %vm344, %v762, %v761
    %764 = vrot.lane.b32.xlu0 %v763, 64
    %v765 = vpop.permute.xlu0 %764
    %v766 = vsel %vm132, %v765, 0
    %768 = vmatprep.subr.mxu0 0.0
    %769 = vmatpush1.msra.mxu0 %v121
    %770 = vmatprep.subr.mxu0 0.0
    %771 = vmatpush1.msra.mxu0 %v122
    %772 = vmatprep.subr.mxu0 0.0
    %773 = vmatpush1.msra.mxu0 %v123
    %774 = vmatprep.subr.mxu0 0.0
    %775 = vmatpush1.msra.mxu0 %v124
    %776 = vmatprep.subr.mxu0 0.0
    %777 = vmatpush1.msra.mxu0 0.0
    %778 = vmatprep.subr.mxu0 0.0
    %779 = vmatpush1.msra.mxu0 0.0
    %780 = vmatprep.subr.mxu0 0.0
    %781 = vmatpush1.msra.mxu0 0.0
    %782 = vmatprep.subr.mxu0 0.0
    %783 = vmatpush1.msra.mxu0 0.0
    %784 = vmatprep.subr.mxu0 0.0
    %785 = vmatpush1.msra.mxu0 0.0
    %786 = vmatprep.subr.mxu0 0.0
    %787 = vmatpush1.msra.mxu0 0.0
    %788 = vmatprep.subr.mxu0 0.0
    %789 = vmatpush1.msra.mxu0 0.0
    %790 = vmatprep.subr.mxu0 0.0
    %791 = vmatpush1.msra.mxu0 0.0
    %792 = vmatprep.subr.mxu0 0.0
    %793 = vmatpush1.msra.mxu0 0.0
    %794 = vmatprep.subr.mxu0 0.0
    %795 = vmatpush1.msra.mxu0 0.0
    %796 = vmatprep.subr.mxu0 0.0
    %797 = vmatpush1.msra.mxu0 0.0
    %798 = vmatprep.subr.mxu0 0.0
    %799 = vmatpush1.msra.mxu0 0.0
    %800 = vmatprep.subr.mxu0 0.0
    %801 = vmatpush1.msra.mxu0 0.0
    %802 = vmatprep.subr.mxu0 0.0
    %803 = vmatpush1.msra.mxu0 0.0
    %804 = vmatprep.subr.mxu0 0.0
    %805 = vmatpush1.msra.mxu0 0.0
    %806 = vmatprep.subr.mxu0 0.0
    %807 = vmatpush1.msra.mxu0 0.0
    %808 = vmatprep.subr.mxu0 0.0
    %809 = vmatpush1.msra.mxu0 0.0
    %810 = vmatprep.subr.mxu0 0.0
    %811 = vmatpush1.msra.mxu0 0.0
    %812 = vmatprep.subr.mxu0 0.0
    %813 = vmatpush1.msra.mxu0 0.0
    %814 = vmatprep.subr.mxu0 0.0
    %815 = vmatpush1.msra.mxu0 0.0
    %816 = vmatprep.subr.mxu0 0.0
    %817 = vmatpush1.msra.mxu0 0.0
    %818 = vmatprep.subr.mxu0 0.0
    %819 = vmatpush1.msra.mxu0 0.0
    %820 = vmatprep.subr.mxu0 0.0
    %821 = vmatpush1.msra.mxu0 0.0
    %822 = vmatprep.subr.mxu0 0.0
    %823 = vmatpush1.msra.mxu0 0.0
    %824 = vmatprep.subr.mxu0 0.0
    %825 = vmatpush1.msra.mxu0 0.0
    %826 = vmatprep.subr.mxu0 0.0
    %827 = vmatpush1.msra.mxu0 0.0
    %828 = vmatprep.subr.mxu0 0.0
    %829 = vmatpush1.msra.mxu0 0.0
    %830 = vmatprep.subr.mxu0 0.0
    %831 = vmatpush1.msra.mxu0 0.0
    %832 = vmatprep.mubr.f32.mxu0 0.0
    %833 = vmatmul.mubr.f32.gmra.mrb[0].mxu0 %v766
    %v834 = vpop.f32.mrb[0].mxu0
    %v835 = vadd.f32 0.0, %v834
    %v836 = vpop.f32.mrb[0].mxu0
    %837 = vdwg.mxu0
    %v839 = vrot.slane %v835, 4
    %v840 = vrot.slane %v835, 5
    %v843 = vadd.f32 %v206, %v839
    %v844 = vadd.f32 %v211, %v840
    %v845 = vxor.u32 %v843, 2147483648
    %v846 = vxor.u32 %v844, 2147483648
    %v847 = vmul.f32 %v845, 1.442695
    %v848 = vpow.pop %v847
    %v849 = vmul.f32 %v846, 1.442695
    %v850 = vpow.pop %v849
    %v851 = vadd.f32 %v848, 1.0
    %v852 = vadd.f32 %v850, 1.0
    %v853 = vrcp.pop %v851
    %v854 = vmul.f32 1.0, %v853
    %v855 = vrcp.pop %v852
    %v856 = vmul.f32 1.0, %v855
    %v857 = vtanh.pop %v843
    %v858 = vtanh.pop %v844
    %v861 = vrot.slane %v745, 7
    %v862 = vrot.slane %v746, 7
    %v865 = vmul.f32 %v854, %v861
    %v866 = vmul.f32 %v856, %v862
    %869 = vrot.lane.b32.xlu0 %v857, 32
    %v870 = vpop.permute.xlu0 %869
    %871 = vrot.lane.b32.xlu0 %v858, 32
    %v872 = vpop.permute.xlu0 %871
    %v875 = vmul.f32 %v854, %v870
    %v876 = vmul.f32 %v856, %v872
    %879 = vrot.lane.b32.xlu0 %v875, 32
    %v880 = vpop.permute.xlu0 %879
    %881 = vrot.lane.b32.xlu0 %v876, 32
    %v882 = vpop.permute.xlu0 %881
    %v885 = vadd.f32 %v865, %v880
    %v886 = vadd.f32 %v866, %v882
    %v887 = vtanh.pop %v885
    %v888 = vtanh.pop %v886
    %891 = vrot.lane.b32.xlu0 %v887, 32
    %v892 = vpop.permute.xlu0 %891
    %893 = vrot.lane.b32.xlu0 %v888, 32
    %v894 = vpop.permute.xlu0 %893
    %v897 = vmul.f32 %v854, %v892
    %v898 = vmul.f32 %v856, %v894
    %v901 = vrot.slane %v897, 4
    %v902 = vrot.slane %v898, 3
    %v903 = vsel %vm344, %v902, %v901
    %904 = vrot.lane.b32.xlu0 %v903, 64
    %v905 = vpop.permute.xlu0 %904
    %v906 = vsel %vm132, %v905, 0
    %908 = vmatprep.subr.mxu0 0.0
    %909 = vmatpush1.msra.mxu0 %v121
    %910 = vmatprep.subr.mxu0 0.0
    %911 = vmatpush1.msra.mxu0 %v122
    %912 = vmatprep.subr.mxu0 0.0
    %913 = vmatpush1.msra.mxu0 %v123
    %914 = vmatprep.subr.mxu0 0.0
    %915 = vmatpush1.msra.mxu0 %v124
    %916 = vmatprep.subr.mxu0 0.0
    %917 = vmatpush1.msra.mxu0 0.0
    %918 = vmatprep.subr.mxu0 0.0
    %919 = vmatpush1.msra.mxu0 0.0
    %920 = vmatprep.subr.mxu0 0.0
    %921 = vmatpush1.msra.mxu0 0.0
    %922 = vmatprep.subr.mxu0 0.0
    %923 = vmatpush1.msra.mxu0 0.0
    %924 = vmatprep.subr.mxu0 0.0
    %925 = vmatpush1.msra.mxu0 0.0
    %926 = vmatprep.subr.mxu0 0.0
    %927 = vmatpush1.msra.mxu0 0.0
    %928 = vmatprep.subr.mxu0 0.0
    %929 = vmatpush1.msra.mxu0 0.0
    %930 = vmatprep.subr.mxu0 0.0
    %931 = vmatpush1.msra.mxu0 0.0
    %932 = vmatprep.subr.mxu0 0.0
    %933 = vmatpush1.msra.mxu0 0.0
    %934 = vmatprep.subr.mxu0 0.0
    %935 = vmatpush1.msra.mxu0 0.0
    %936 = vmatprep.subr.mxu0 0.0
    %937 = vmatpush1.msra.mxu0 0.0
    %938 = vmatprep.subr.mxu0 0.0
    %939 = vmatpush1.msra.mxu0 0.0
    %940 = vmatprep.subr.mxu0 0.0
    %941 = vmatpush1.msra.mxu0 0.0
    %942 = vmatprep.subr.mxu0 0.0
    %943 = vmatpush1.msra.mxu0 0.0
    %944 = vmatprep.subr.mxu0 0.0
    %945 = vmatpush1.msra.mxu0 0.0
    %946 = vmatprep.subr.mxu0 0.0
    %947 = vmatpush1.msra.mxu0 0.0
    %948 = vmatprep.subr.mxu0 0.0
    %949 = vmatpush1.msra.mxu0 0.0
    %950 = vmatprep.subr.mxu0 0.0
    %951 = vmatpush1.msra.mxu0 0.0
    %952 = vmatprep.subr.mxu0 0.0
    %953 = vmatpush1.msra.mxu0 0.0
    %954 = vmatprep.subr.mxu0 0.0
    %955 = vmatpush1.msra.mxu0 0.0
    %956 = vmatprep.subr.mxu0 0.0
    %957 = vmatpush1.msra.mxu0 0.0
    %958 = vmatprep.subr.mxu0 0.0
    %959 = vmatpush1.msra.mxu0 0.0
    %960 = vmatprep.subr.mxu0 0.0
    %961 = vmatpush1.msra.mxu0 0.0
    %962 = vmatprep.subr.mxu0 0.0
    %963 = vmatpush1.msra.mxu0 0.0
    %964 = vmatprep.subr.mxu0 0.0
    %965 = vmatpush1.msra.mxu0 0.0
    %966 = vmatprep.subr.mxu0 0.0
    %967 = vmatpush1.msra.mxu0 0.0
    %968 = vmatprep.subr.mxu0 0.0
    %969 = vmatpush1.msra.mxu0 0.0
    %970 = vmatprep.subr.mxu0 0.0
    %971 = vmatpush1.msra.mxu0 0.0
    %972 = vmatprep.mubr.f32.mxu0 0.0
    %973 = vmatmul.mubr.f32.gmra.mrb[0].mxu0 %v906
    %v974 = vpop.f32.mrb[0].mxu0
    %v975 = vadd.f32 0.0, %v974
    %v976 = vpop.f32.mrb[0].mxu0
    %977 = vdwg.mxu0
    %v979 = vrot.slane %v975, 3
    %v980 = vrot.slane %v975, 4
    %v983 = vadd.f32 %v206, %v979
    %v984 = vadd.f32 %v211, %v980
    %v985 = vxor.u32 %v983, 2147483648
    %v986 = vxor.u32 %v984, 2147483648
    %v987 = vmul.f32 %v985, 1.442695
    %v988 = vpow.pop %v987
    %v989 = vmul.f32 %v986, 1.442695
    %v990 = vpow.pop %v989
    %v991 = vadd.f32 %v988, 1.0
    %v992 = vadd.f32 %v990, 1.0
    %v993 = vrcp.pop %v991
    %v994 = vmul.f32 1.0, %v993
    %v995 = vrcp.pop %v992
    %v996 = vmul.f32 1.0, %v995
    %v997 = vtanh.pop %v983
    %v998 = vtanh.pop %v984
    %v1001 = vrot.slane %v885, 7
    %v1002 = vrot.slane %v886, 7
    %v1005 = vmul.f32 %v994, %v1001
    %v1006 = vmul.f32 %v996, %v1002
    %1009 = vrot.lane.b32.xlu0 %v997, 32
    %v1010 = vpop.permute.xlu0 %1009
    %1011 = vrot.lane.b32.xlu0 %v998, 32
    %v1012 = vpop.permute.xlu0 %1011
    %v1015 = vmul.f32 %v994, %v1010
    %v1016 = vmul.f32 %v996, %v1012
    %1019 = vrot.lane.b32.xlu0 %v1015, 32
    %v1020 = vpop.permute.xlu0 %1019
    %1021 = vrot.lane.b32.xlu0 %v1016, 32
    %v1022 = vpop.permute.xlu0 %1021
    %v1025 = vadd.f32 %v1005, %v1020
    %v1026 = vadd.f32 %v1006, %v1022
    %v1027 = vtanh.pop %v1025
    %v1028 = vtanh.pop %v1026
    %1031 = vrot.lane.b32.xlu0 %v1027, 32
    %v1032 = vpop.permute.xlu0 %1031
    %1033 = vrot.lane.b32.xlu0 %v1028, 32
    %v1034 = vpop.permute.xlu0 %1033
    %v1037 = vmul.f32 %v994, %v1032
    %v1038 = vmul.f32 %v996, %v1034
    %v1041 = vrot.slane %v1037, 5
    %v1042 = vrot.slane %v1038, 4
    %v1043 = vsel %vm344, %v1042, %v1041
    %1044 = vrot.lane.b32.xlu0 %v1043, 64
    %v1045 = vpop.permute.xlu0 %1044
    %v1046 = vsel %vm132, %v1045, 0
    %1048 = vmatprep.subr.mxu0 0.0
    %1049 = vmatpush1.msra.mxu0 %v121
    %1050 = vmatprep.subr.mxu0 0.0
    %1051 = vmatpush1.msra.mxu0 %v122
    %1052 = vmatprep.subr.mxu0 0.0
    %1053 = vmatpush1.msra.mxu0 %v123
    %1054 = vmatprep.subr.mxu0 0.0
    %1055 = vmatpush1.msra.mxu0 %v124
    %1056 = vmatprep.subr.mxu0 0.0
    %1057 = vmatpush1.msra.mxu0 0.0
    %1058 = vmatprep.subr.mxu0 0.0
    %1059 = vmatpush1.msra.mxu0 0.0
    %1060 = vmatprep.subr.mxu0 0.0
    %1061 = vmatpush1.msra.mxu0 0.0
    %1062 = vmatprep.subr.mxu0 0.0
    %1063 = vmatpush1.msra.mxu0 0.0
    %1064 = vmatprep.subr.mxu0 0.0
    %1065 = vmatpush1.msra.mxu0 0.0
    %1066 = vmatprep.subr.mxu0 0.0
    %1067 = vmatpush1.msra.mxu0 0.0
    %1068 = vmatprep.subr.mxu0 0.0
    %1069 = vmatpush1.msra.mxu0 0.0
    %1070 = vmatprep.subr.mxu0 0.0
    %1071 = vmatpush1.msra.mxu0 0.0
    %1072 = vmatprep.subr.mxu0 0.0
    %1073 = vmatpush1.msra.mxu0 0.0
    %1074 = vmatprep.subr.mxu0 0.0
    %1075 = vmatpush1.msra.mxu0 0.0
    %1076 = vmatprep.subr.mxu0 0.0
    %1077 = vmatpush1.msra.mxu0 0.0
    %1078 = vmatprep.subr.mxu0 0.0
    %1079 = vmatpush1.msra.mxu0 0.0
    %1080 = vmatprep.subr.mxu0 0.0
    %1081 = vmatpush1.msra.mxu0 0.0
    %1082 = vmatprep.subr.mxu0 0.0
    %1083 = vmatpush1.msra.mxu0 0.0
    %1084 = vmatprep.subr.mxu0 0.0
    %1085 = vmatpush1.msra.mxu0 0.0
    %1086 = vmatprep.subr.mxu0 0.0
    %1087 = vmatpush1.msra.mxu0 0.0
    %1088 = vmatprep.subr.mxu0 0.0
    %1089 = vmatpush1.msra.mxu0 0.0
    %1090 = vmatprep.subr.mxu0 0.0
    %1091 = vmatpush1.msra.mxu0 0.0
    %1092 = vmatprep.subr.mxu0 0.0
    %1093 = vmatpush1.msra.mxu0 0.0
    %1094 = vmatprep.subr.mxu0 0.0
    %1095 = vmatpush1.msra.mxu0 0.0
    %1096 = vmatprep.subr.mxu0 0.0
    %1097 = vmatpush1.msra.mxu0 0.0
    %1098 = vmatprep.subr.mxu0 0.0
    %1099 = vmatpush1.msra.mxu0 0.0
    %1100 = vmatprep.subr.mxu0 0.0
    %1101 = vmatpush1.msra.mxu0 0.0
    %1102 = vmatprep.subr.mxu0 0.0
    %1103 = vmatpush1.msra.mxu0 0.0
    %1104 = vmatprep.subr.mxu0 0.0
    %1105 = vmatpush1.msra.mxu0 0.0
    %1106 = vmatprep.subr.mxu0 0.0
    %1107 = vmatpush1.msra.mxu0 0.0
    %1108 = vmatprep.subr.mxu0 0.0
    %1109 = vmatpush1.msra.mxu0 0.0
    %1110 = vmatprep.subr.mxu0 0.0
    %1111 = vmatpush1.msra.mxu0 0.0
    %1112 = vmatprep.mubr.f32.mxu0 0.0
    %1113 = vmatmul.mubr.f32.gmra.mrb[0].mxu0 %v1046
    %v1114 = vpop.f32.mrb[0].mxu0
    %v1115 = vadd.f32 0.0, %v1114
    %v1116 = vpop.f32.mrb[0].mxu0
    %1117 = vdwg.mxu0
    %v1119 = vrot.slane %v1115, 2
    %v1120 = vrot.slane %v1115, 3
    %v1123 = vadd.f32 %v206, %v1119
    %v1124 = vadd.f32 %v211, %v1120
    %v1125 = vxor.u32 %v1123, 2147483648
    %v1126 = vxor.u32 %v1124, 2147483648
    %v1127 = vmul.f32 %v1125, 1.442695
    %v1128 = vpow.pop %v1127
    %v1129 = vmul.f32 %v1126, 1.442695
    %v1130 = vpow.pop %v1129
    %v1131 = vadd.f32 %v1128, 1.0
    %v1132 = vadd.f32 %v1130, 1.0
    %v1133 = vrcp.pop %v1131
    %v1134 = vmul.f32 1.0, %v1133
    %v1135 = vrcp.pop %v1132
    %v1136 = vmul.f32 1.0, %v1135
    %v1137 = vtanh.pop %v1123
    %v1138 = vtanh.pop %v1124
    %v1141 = vrot.slane %v1025, 7
    %v1142 = vrot.slane %v1026, 7
    %v1145 = vmul.f32 %v1134, %v1141
    %v1146 = vmul.f32 %v1136, %v1142
    %1149 = vrot.lane.b32.xlu0 %v1137, 32
    %v1150 = vpop.permute.xlu0 %1149
    %1151 = vrot.lane.b32.xlu0 %v1138, 32
    %v1152 = vpop.permute.xlu0 %1151
    %v1155 = vmul.f32 %v1134, %v1150
    %v1156 = vmul.f32 %v1136, %v1152
    %1159 = vrot.lane.b32.xlu0 %v1155, 32
    %v1160 = vpop.permute.xlu0 %1159
    %1161 = vrot.lane.b32.xlu0 %v1156, 32
    %v1162 = vpop.permute.xlu0 %1161
    %v1165 = vadd.f32 %v1145, %v1160
    %v1166 = vadd.f32 %v1146, %v1162
    %v1167 = vtanh.pop %v1165
    %v1168 = vtanh.pop %v1166
    %1171 = vrot.lane.b32.xlu0 %v1167, 32
    %v1172 = vpop.permute.xlu0 %1171
    %1173 = vrot.lane.b32.xlu0 %v1168, 32
    %v1174 = vpop.permute.xlu0 %1173
    %v1177 = vmul.f32 %v1134, %v1172
    %v1178 = vmul.f32 %v1136, %v1174
    %v1181 = vrot.slane %v1177, 6
    %v1182 = vrot.slane %v1178, 5
    %v1183 = vsel %vm344, %v1182, %v1181
    %1184 = vrot.lane.b32.xlu0 %v1183, 64
    %v1185 = vpop.permute.xlu0 %1184
    %v1186 = vsel %vm132, %v1185, 0
    %1188 = vmatprep.subr.mxu0 0.0
    %1189 = vmatpush1.msra.mxu0 %v121
    %1190 = vmatprep.subr.mxu0 0.0
    %1191 = vmatpush1.msra.mxu0 %v122
    %1192 = vmatprep.subr.mxu0 0.0
    %1193 = vmatpush1.msra.mxu0 %v123
    %1194 = vmatprep.subr.mxu0 0.0
    %1195 = vmatpush1.msra.mxu0 %v124
    %1196 = vmatprep.subr.mxu0 0.0
    %1197 = vmatpush1.msra.mxu0 0.0
    %1198 = vmatprep.subr.mxu0 0.0
    %1199 = vmatpush1.msra.mxu0 0.0
    %1200 = vmatprep.subr.mxu0 0.0
    %1201 = vmatpush1.msra.mxu0 0.0
    %1202 = vmatprep.subr.mxu0 0.0
    %1203 = vmatpush1.msra.mxu0 0.0
    %1204 = vmatprep.subr.mxu0 0.0
    %1205 = vmatpush1.msra.mxu0 0.0
    %1206 = vmatprep.subr.mxu0 0.0
    %1207 = vmatpush1.msra.mxu0 0.0
    %1208 = vmatprep.subr.mxu0 0.0
    %1209 = vmatpush1.msra.mxu0 0.0
    %1210 = vmatprep.subr.mxu0 0.0
    %1211 = vmatpush1.msra.mxu0 0.0
    %1212 = vmatprep.subr.mxu0 0.0
    %1213 = vmatpush1.msra.mxu0 0.0
    %1214 = vmatprep.subr.mxu0 0.0
    %1215 = vmatpush1.msra.mxu0 0.0
    %1216 = vmatprep.subr.mxu0 0.0
    %1217 = vmatpush1.msra.mxu0 0.0
    %1218 = vmatprep.subr.mxu0 0.0
    %1219 = vmatpush1.msra.mxu0 0.0
    %1220 = vmatprep.subr.mxu0 0.0
    %1221 = vmatpush1.msra.mxu0 0.0
    %1222 = vmatprep.subr.mxu0 0.0
    %1223 = vmatpush1.msra.mxu0 0.0
    %1224 = vmatprep.subr.mxu0 0.0
    %1225 = vmatpush1.msra.mxu0 0.0
    %1226 = vmatprep.subr.mxu0 0.0
    %1227 = vmatpush1.msra.mxu0 0.0
    %1228 = vmatprep.subr.mxu0 0.0
    %1229 = vmatpush1.msra.mxu0 0.0
    %1230 = vmatprep.subr.mxu0 0.0
    %1231 = vmatpush1.msra.mxu0 0.0
    %1232 = vmatprep.subr.mxu0 0.0
    %1233 = vmatpush1.msra.mxu0 0.0
    %1234 = vmatprep.subr.mxu0 0.0
    %1235 = vmatpush1.msra.mxu0 0.0
    %1236 = vmatprep.subr.mxu0 0.0
    %1237 = vmatpush1.msra.mxu0 0.0
    %1238 = vmatprep.subr.mxu0 0.0
    %1239 = vmatpush1.msra.mxu0 0.0
    %1240 = vmatprep.subr.mxu0 0.0
    %1241 = vmatpush1.msra.mxu0 0.0
    %1242 = vmatprep.subr.mxu0 0.0
    %1243 = vmatpush1.msra.mxu0 0.0
    %1244 = vmatprep.subr.mxu0 0.0
    %1245 = vmatpush1.msra.mxu0 0.0
    %1246 = vmatprep.subr.mxu0 0.0
    %1247 = vmatpush1.msra.mxu0 0.0
    %1248 = vmatprep.subr.mxu0 0.0
    %1249 = vmatpush1.msra.mxu0 0.0
    %1250 = vmatprep.subr.mxu0 0.0
    %1251 = vmatpush1.msra.mxu0 0.0
    %1252 = vmatprep.mubr.f32.mxu0 0.0
    %1253 = vmatmul.mubr.f32.gmra.mrb[0].mxu0 %v1186
    %v1254 = vpop.f32.mrb[0].mxu0
    %v1255 = vadd.f32 0.0, %v1254
    %v1256 = vpop.f32.mrb[0].mxu0
    %1257 = vdwg.mxu0
    %v1259 = vrot.slane %v1255, 1
    %v1260 = vrot.slane %v1255, 2
    %v1263 = vadd.f32 %v206, %v1259
    %v1264 = vadd.f32 %v211, %v1260
    %v1265 = vxor.u32 %v1263, 2147483648
    %v1266 = vxor.u32 %v1264, 2147483648
    %v1267 = vmul.f32 %v1265, 1.442695
    %v1268 = vpow.pop %v1267
    %v1269 = vmul.f32 %v1266, 1.442695
    %v1270 = vpow.pop %v1269
    %v1271 = vadd.f32 %v1268, 1.0
    %v1272 = vadd.f32 %v1270, 1.0
    %v1273 = vrcp.pop %v1271
    %v1274 = vmul.f32 1.0, %v1273
    %v1275 = vrcp.pop %v1272
    %v1276 = vmul.f32 1.0, %v1275
    %v1277 = vtanh.pop %v1263
    %v1278 = vtanh.pop %v1264
    %v1281 = vrot.slane %v1165, 7
    %v1282 = vrot.slane %v1166, 7
    %v1285 = vmul.f32 %v1274, %v1281
    %v1286 = vmul.f32 %v1276, %v1282
    %1289 = vrot.lane.b32.xlu0 %v1277, 32
    %v1290 = vpop.permute.xlu0 %1289
    %1291 = vrot.lane.b32.xlu0 %v1278, 32
    %v1292 = vpop.permute.xlu0 %1291
    %v1295 = vmul.f32 %v1274, %v1290
    %v1296 = vmul.f32 %v1276, %v1292
    %1299 = vrot.lane.b32.xlu0 %v1295, 32
    %v1300 = vpop.permute.xlu0 %1299
    %1301 = vrot.lane.b32.xlu0 %v1296, 32
    %v1302 = vpop.permute.xlu0 %1301
    %v1305 = vadd.f32 %v1285, %v1300
    %v1306 = vadd.f32 %v1286, %v1302
    %v1307 = vtanh.pop %v1305
    %v1308 = vtanh.pop %v1306
    %1311 = vrot.lane.b32.xlu0 %v1307, 32
    %v1312 = vpop.permute.xlu0 %1311
    %1313 = vrot.lane.b32.xlu0 %v1308, 32
    %v1314 = vpop.permute.xlu0 %1313
    %v1317 = vmul.f32 %v1274, %v1312
    %v1318 = vmul.f32 %v1276, %v1314
    %vm1319 = vcmask 1040384
    %v1320 = vsel %vm1319, %v339, %v478
    %v1321 = vsel %vm1319, %v340, %v479
    %vm1322 = vcmask 1041408
    %v1323 = vsel %vm1322, %v1320, %v617
    %v1324 = vsel %vm1322, %v1321, %v618
    %vm1325 = vcmask 1042432
    %v1326 = vsel %vm1325, %v1323, %v757
    %v1327 = vsel %vm1325, %v1324, %v758
    %vm1328 = vcmask 1043456
    %v1329 = vsel %vm1328, %v1326, %v897
    %v1330 = vsel %vm1328, %v1327, %v898
    %vm1331 = vcmask 1044480
    %v1332 = vsel %vm1331, %v1329, %v1037
    %v1333 = vsel %vm1331, %v1330, %v1038
    %vm1334 = vcmask 1045504
    %v1335 = vsel %vm1334, %v1332, %v1177
    %v1336 = vsel %vm1334, %v1333, %v1178
    %vm1337 = vcmask 1046528
    %v1338 = vsel %vm1337, %v1335, %v1317
    %v1339 = vsel %vm1337, %v1336, %v1318
    %v1340 = vld [vmem:[#allocation8] sm:$0xff]
    %v1341 = vld [vmem:[#allocation8 + $0x8] sm:$0xff]
    %v1342 = vld [vmem:[#allocation8 + $0x10] sm:$0xff]
    %v1343 = vld [vmem:[#allocation8 + $0x18] sm:$0xff]
    %v1344 = vld [vmem:[#allocation10] sm:$0xff]
    %v1345 = vld [vmem:[#allocation10 + $0x8] sm:$0xff]
    %v1346 = vld [vmem:[#allocation10 + $0x10] sm:$0xff]
    %v1347 = vld [vmem:[#allocation10 + $0x18] sm:$0xff]
    %v1348 = vld [vmem:[%s6] sm:$0x1]
    %v1350 = vlaneseq
    %v1351 = vshrl.u32 %v1350, 7
    %v1352 = vsub.s32 0, %v1351
    %v1353 = vrot.slane %v1348, %v1352
    %1357 = vrot.lane.b32.xlu0 %v1338, 64
    %v1358 = vpop.permute.xlu0 %1357
    %1359 = vrot.lane.b32.xlu0 %v1339, 64
    %v1360 = vpop.permute.xlu0 %1359
    %v1361 = vsel %vm132, %v1358, 0
    %v1363 = vsel %vm132, %v1360, 0
    %1365 = vmatprep.subr.mxu0 0.0
    %1366 = vmatpush1.msra.mxu0 %v1340
    %1367 = vmatprep.subr.mxu0 0.0
    %1368 = vmatpush1.msra.mxu0 %v1341
    %1369 = vmatprep.subr.mxu0 0.0
    %1370 = vmatpush1.msra.mxu0 %v1342
    %1371 = vmatprep.subr.mxu0 0.0
    %1372 = vmatpush1.msra.mxu0 %v1343
    %1373 = vmatprep.subr.mxu0 0.0
    %1374 = vmatpush1.msra.mxu0 0.0
    %1375 = vmatprep.subr.mxu0 0.0
    %1376 = vmatpush1.msra.mxu0 0.0
    %1377 = vmatprep.subr.mxu0 0.0
    %1378 = vmatpush1.msra.mxu0 0.0
    %1379 = vmatprep.subr.mxu0 0.0
    %1380 = vmatpush1.msra.mxu0 0.0
    %1381 = vmatprep.subr.mxu0 0.0
    %1382 = vmatpush1.msra.mxu0 0.0
    %1383 = vmatprep.subr.mxu0 0.0
    %1384 = vmatpush1.msra.mxu0 0.0
    %1385 = vmatprep.subr.mxu0 0.0
    %1386 = vmatpush1.msra.mxu0 0.0
    %1387 = vmatprep.subr.mxu0 0.0
    %1388 = vmatpush1.msra.mxu0 0.0
    %1389 = vmatprep.subr.mxu0 0.0
    %1390 = vmatpush1.msra.mxu0 0.0
    %1391 = vmatprep.subr.mxu0 0.0
    %1392 = vmatpush1.msra.mxu0 0.0
    %1393 = vmatprep.subr.mxu0 0.0
    %1394 = vmatpush1.msra.mxu0 0.0
    %1395 = vmatprep.subr.mxu0 0.0
    %1396 = vmatpush1.msra.mxu0 0.0
    %1397 = vmatprep.subr.mxu0 0.0
    %1398 = vmatpush1.msra.mxu0 0.0
    %1399 = vmatprep.subr.mxu0 0.0
    %1400 = vmatpush1.msra.mxu0 0.0
    %1401 = vmatprep.subr.mxu0 0.0
    %1402 = vmatpush1.msra.mxu0 0.0
    %1403 = vmatprep.subr.mxu0 0.0
    %1404 = vmatpush1.msra.mxu0 0.0
    %1405 = vmatprep.subr.mxu0 0.0
    %1406 = vmatpush1.msra.mxu0 0.0
    %1407 = vmatprep.subr.mxu0 0.0
    %1408 = vmatpush1.msra.mxu0 0.0
    %1409 = vmatprep.subr.mxu0 0.0
    %1410 = vmatpush1.msra.mxu0 0.0
    %1411 = vmatprep.subr.mxu0 0.0
    %1412 = vmatpush1.msra.mxu0 0.0
    %1413 = vmatprep.subr.mxu0 0.0
    %1414 = vmatpush1.msra.mxu0 0.0
    %1415 = vmatprep.subr.mxu0 0.0
    %1416 = vmatpush1.msra.mxu0 0.0
    %1417 = vmatprep.subr.mxu0 0.0
    %1418 = vmatpush1.msra.mxu0 0.0
    %1419 = vmatprep.subr.mxu0 0.0
    %1420 = vmatpush1.msra.mxu0 0.0
    %1421 = vmatprep.subr.mxu0 0.0
    %1422 = vmatpush1.msra.mxu0 0.0
    %1423 = vmatprep.subr.mxu0 0.0
    %1424 = vmatpush1.msra.mxu0 0.0
    %1425 = vmatprep.subr.mxu0 0.0
    %1426 = vmatpush1.msra.mxu0 0.0
    %1427 = vmatprep.subr.mxu0 0.0
    %1428 = vmatpush1.msra.mxu0 0.0
    %1429 = vmatprep.mubr.f32.mxu0 0.0
    %1430 = vmatmul.mubr.f32.gmra.mrb[0].mxu0 %v1361
    %v1431 = vpop.f32.mrb[0].mxu0
    %v1432 = vadd.f32 %v1353, %v1431
    %v1433 = vpop.f32.mrb[0].mxu0
    %1434 = vmatprep.mubr.f32.mxu0 0.0
    %1435 = vmatmul.mubr.f32.gmra.mrb[0].mxu0 %v1363
    %v1436 = vpop.f32.mrb[0].mxu0
    %v1437 = vadd.f32 %v1353, %v1436
    %v1438 = vpop.f32.mrb[0].mxu0
    %1439 = vdwg.mxu0
    %1440 = vmatprep.subr.mxu0 0.0
    %1441 = vmatpush1.msra.mxu0 %v1344
    %1442 = vmatprep.subr.mxu0 0.0
    %1443 = vmatpush1.msra.mxu0 %v1345
    %1444 = vmatprep.subr.mxu0 0.0
    %1445 = vmatpush1.msra.mxu0 %v1346
    %1446 = vmatprep.subr.mxu0 0.0
    %1447 = vmatpush1.msra.mxu0 %v1347
    %1448 = vmatprep.subr.mxu0 0.0
    %1449 = vmatpush1.msra.mxu0 0.0
    %1450 = vmatprep.subr.mxu0 0.0
    %1451 = vmatpush1.msra.mxu0 0.0
    %1452 = vmatprep.subr.mxu0 0.0
    %1453 = vmatpush1.msra.mxu0 0.0
    %1454 = vmatprep.subr.mxu0 0.0
    %1455 = vmatpush1.msra.mxu0 0.0
    %1456 = vmatprep.subr.mxu0 0.0
    %1457 = vmatpush1.msra.mxu0 0.0
    %1458 = vmatprep.subr.mxu0 0.0
    %1459 = vmatpush1.msra.mxu0 0.0
    %1460 = vmatprep.subr.mxu0 0.0
    %1461 = vmatpush1.msra.mxu0 0.0
    %1462 = vmatprep.subr.mxu0 0.0
    %1463 = vmatpush1.msra.mxu0 0.0
    %1464 = vmatprep.subr.mxu0 0.0
    %1465 = vmatpush1.msra.mxu0 0.0
    %1466 = vmatprep.subr.mxu0 0.0
    %1467 = vmatpush1.msra.mxu0 0.0
    %1468 = vmatprep.subr.mxu0 0.0
    %1469 = vmatpush1.msra.mxu0 0.0
    %1470 = vmatprep.subr.mxu0 0.0
    %1471 = vmatpush1.msra.mxu0 0.0
    %1472 = vmatprep.subr.mxu0 0.0
    %1473 = vmatpush1.msra.mxu0 0.0
    %1474 = vmatprep.subr.mxu0 0.0
    %1475 = vmatpush1.msra.mxu0 0.0
    %1476 = vmatprep.subr.mxu0 0.0
    %1477 = vmatpush1.msra.mxu0 0.0
    %1478 = vmatprep.subr.mxu0 0.0
    %1479 = vmatpush1.msra.mxu0 0.0
    %1480 = vmatprep.subr.mxu0 0.0
    %1481 = vmatpush1.msra.mxu0 0.0
    %1482 = vmatprep.subr.mxu0 0.0
    %1483 = vmatpush1.msra.mxu0 0.0
    %1484 = vmatprep.subr.mxu0 0.0
    %1485 = vmatpush1.msra.mxu0 0.0
    %1486 = vmatprep.subr.mxu0 0.0
    %1487 = vmatpush1.msra.mxu0 0.0
    %1488 = vmatprep.subr.mxu0 0.0
    %1489 = vmatpush1.msra.mxu0 0.0
    %1490 = vmatprep.subr.mxu0 0.0
    %1491 = vmatpush1.msra.mxu0 0.0
    %1492 = vmatprep.subr.mxu0 0.0
    %1493 = vmatpush1.msra.mxu0 0.0
    %1494 = vmatprep.subr.mxu0 0.0
    %1495 = vmatpush1.msra.mxu0 0.0
    %1496 = vmatprep.subr.mxu0 0.0
    %1497 = vmatpush1.msra.mxu0 0.0
    %1498 = vmatprep.subr.mxu0 0.0
    %1499 = vmatpush1.msra.mxu0 0.0
    %1500 = vmatprep.subr.mxu0 0.0
    %1501 = vmatpush1.msra.mxu0 0.0
    %1502 = vmatprep.subr.mxu0 0.0
    %1503 = vmatpush1.msra.mxu0 0.0
    %1504 = vmatprep.mubr.f32.mxu0 0.0
    %1505 = vmatmul.mubr.f32.gmra.mrb[0].mxu0 %v215
    %v1506 = vpop.f32.mrb[0].mxu0
    %v1507 = vadd.f32 0.0, %v1506
    %v1508 = vpop.f32.mrb[0].mxu0
    %1509 = vdwg.mxu0
    %v1511 = vrot.slane %v1507, 1
    %v1514 = vadd.f32 %v1432, %v1507
    %v1515 = vadd.f32 %v1437, %v1511
    %v1516 = vxor.u32 %v1514, 2147483648
    %v1517 = vxor.u32 %v1515, 2147483648
    %v1518 = vmul.f32 %v1516, 1.442695
    %v1519 = vpow.pop %v1518
    %v1520 = vmul.f32 %v1517, 1.442695
    %v1521 = vpow.pop %v1520
    %v1522 = vadd.f32 %v1519, 1.0
    %v1523 = vadd.f32 %v1521, 1.0
    %v1524 = vrcp.pop %v1522
    %v1525 = vmul.f32 1.0, %v1524
    %v1526 = vrcp.pop %v1523
    %v1527 = vmul.f32 1.0, %v1526
    %v1528 = vtanh.pop %v1514
    %v1529 = vtanh.pop %v1515
    %v1530 = vmul.f32 %v1525, 0.0
    %v1531 = vmul.f32 %v1527, 0.0
    %1534 = vrot.lane.b32.xlu0 %v1528, 32
    %v1535 = vpop.permute.xlu0 %1534
    %1536 = vrot.lane.b32.xlu0 %v1529, 32
    %v1537 = vpop.permute.xlu0 %1536
    %v1540 = vmul.f32 %v1525, %v1535
    %v1541 = vmul.f32 %v1527, %v1537
    %1544 = vrot.lane.b32.xlu0 %v1540, 32
    %v1545 = vpop.permute.xlu0 %1544
    %1546 = vrot.lane.b32.xlu0 %v1541, 32
    %v1547 = vpop.permute.xlu0 %1546
    %v1550 = vadd.f32 %v1530, %v1545
    %v1551 = vadd.f32 %v1531, %v1547
    %v1552 = vtanh.pop %v1550
    %v1553 = vtanh.pop %v1551
    %1556 = vrot.lane.b32.xlu0 %v1552, 32
    %v1557 = vpop.permute.xlu0 %1556
    %1558 = vrot.lane.b32.xlu0 %v1553, 32
    %v1559 = vpop.permute.xlu0 %1558
    %v1562 = vmul.f32 %v1525, %v1557
    %v1563 = vmul.f32 %v1527, %v1559
    %v1566 = vrot.slane %v1563, 7
    %v1567 = vsel %vm344, %v1566, %v1562
    %1568 = vrot.lane.b32.xlu0 %v1567, 64
    %v1569 = vpop.permute.xlu0 %1568
    %v1570 = vsel %vm132, %v1569, 0
    %1572 = vmatprep.subr.mxu0 0.0
    %1573 = vmatpush1.msra.mxu0 %v1344
    %1574 = vmatprep.subr.mxu0 0.0
    %1575 = vmatpush1.msra.mxu0 %v1345
    %1576 = vmatprep.subr.mxu0 0.0
    %1577 = vmatpush1.msra.mxu0 %v1346
    %1578 = vmatprep.subr.mxu0 0.0
    %1579 = vmatpush1.msra.mxu0 %v1347
    %1580 = vmatprep.subr.mxu0 0.0
    %1581 = vmatpush1.msra.mxu0 0.0
    %1582 = vmatprep.subr.mxu0 0.0
    %1583 = vmatpush1.msra.mxu0 0.0
    %1584 = vmatprep.subr.mxu0 0.0
    %1585 = vmatpush1.msra.mxu0 0.0
    %1586 = vmatprep.subr.mxu0 0.0
    %1587 = vmatpush1.msra.mxu0 0.0
    %1588 = vmatprep.subr.mxu0 0.0
    %1589 = vmatpush1.msra.mxu0 0.0
    %1590 = vmatprep.subr.mxu0 0.0
    %1591 = vmatpush1.msra.mxu0 0.0
    %1592 = vmatprep.subr.mxu0 0.0
    %1593 = vmatpush1.msra.mxu0 0.0
    %1594 = vmatprep.subr.mxu0 0.0
    %1595 = vmatpush1.msra.mxu0 0.0
    %1596 = vmatprep.subr.mxu0 0.0
    %1597 = vmatpush1.msra.mxu0 0.0
    %1598 = vmatprep.subr.mxu0 0.0
    %1599 = vmatpush1.msra.mxu0 0.0
    %1600 = vmatprep.subr.mxu0 0.0
    %1601 = vmatpush1.msra.mxu0 0.0
    %1602 = vmatprep.subr.mxu0 0.0
    %1603 = vmatpush1.msra.mxu0 0.0
    %1604 = vmatprep.subr.mxu0 0.0
    %1605 = vmatpush1.msra.mxu0 0.0
    %1606 = vmatprep.subr.mxu0 0.0
    %1607 = vmatpush1.msra.mxu0 0.0
    %1608 = vmatprep.subr.mxu0 0.0
    %1609 = vmatpush1.msra.mxu0 0.0
    %1610 = vmatprep.subr.mxu0 0.0
    %1611 = vmatpush1.msra.mxu0 0.0
    %1612 = vmatprep.subr.mxu0 0.0
    %1613 = vmatpush1.msra.mxu0 0.0
    %1614 = vmatprep.subr.mxu0 0.0
    %1615 = vmatpush1.msra.mxu0 0.0
    %1616 = vmatprep.subr.mxu0 0.0
    %1617 = vmatpush1.msra.mxu0 0.0
    %1618 = vmatprep.subr.mxu0 0.0
    %1619 = vmatpush1.msra.mxu0 0.0
    %1620 = vmatprep.subr.mxu0 0.0
    %1621 = vmatpush1.msra.mxu0 0.0
    %1622 = vmatprep.subr.mxu0 0.0
    %1623 = vmatpush1.msra.mxu0 0.0
    %1624 = vmatprep.subr.mxu0 0.0
    %1625 = vmatpush1.msra.mxu0 0.0
    %1626 = vmatprep.subr.mxu0 0.0
    %1627 = vmatpush1.msra.mxu0 0.0
    %1628 = vmatprep.subr.mxu0 0.0
    %1629 = vmatpush1.msra.mxu0 0.0
    %1630 = vmatprep.subr.mxu0 0.0
    %1631 = vmatpush1.msra.mxu0 0.0
    %1632 = vmatprep.subr.mxu0 0.0
    %1633 = vmatpush1.msra.mxu0 0.0
    %1634 = vmatprep.subr.mxu0 0.0
    %1635 = vmatpush1.msra.mxu0 0.0
    %1636 = vmatprep.mubr.f32.mxu0 0.0
    %1637 = vmatmul.mubr.f32.gmra.mrb[0].mxu0 %v1570
    %v1638 = vpop.f32.mrb[0].mxu0
    %v1639 = vadd.f32 0.0, %v1638
    %v1640 = vpop.f32.mrb[0].mxu0
    %1641 = vdwg.mxu0
    %v1643 = vrot.slane %v1639, 7
    %v1646 = vadd.f32 %v1432, %v1643
    %v1647 = vadd.f32 %v1437, %v1639
    %v1648 = vxor.u32 %v1646, 2147483648
    %v1649 = vxor.u32 %v1647, 2147483648
    %v1650 = vmul.f32 %v1648, 1.442695
    %v1651 = vpow.pop %v1650
    %v1652 = vmul.f32 %v1649, 1.442695
    %v1653 = vpow.pop %v1652
    %v1654 = vadd.f32 %v1651, 1.0
    %v1655 = vadd.f32 %v1653, 1.0
    %v1656 = vrcp.pop %v1654
    %v1657 = vmul.f32 1.0, %v1656
    %v1658 = vrcp.pop %v1655
    %v1659 = vmul.f32 1.0, %v1658
    %v1660 = vtanh.pop %v1646
    %v1661 = vtanh.pop %v1647
    %v1664 = vrot.slane %v1550, 7
    %v1665 = vrot.slane %v1551, 7
    %v1668 = vmul.f32 %v1657, %v1664
    %v1669 = vmul.f32 %v1659, %v1665
    %1672 = vrot.lane.b32.xlu0 %v1660, 32
    %v1673 = vpop.permute.xlu0 %1672
    %1674 = vrot.lane.b32.xlu0 %v1661, 32
    %v1675 = vpop.permute.xlu0 %1674
    %v1678 = vmul.f32 %v1657, %v1673
    %v1679 = vmul.f32 %v1659, %v1675
    %1682 = vrot.lane.b32.xlu0 %v1678, 32
    %v1683 = vpop.permute.xlu0 %1682
    %1684 = vrot.lane.b32.xlu0 %v1679, 32
    %v1685 = vpop.permute.xlu0 %1684
    %v1688 = vadd.f32 %v1668, %v1683
    %v1689 = vadd.f32 %v1669, %v1685
    %v1690 = vtanh.pop %v1688
    %v1691 = vtanh.pop %v1689
    %1694 = vrot.lane.b32.xlu0 %v1690, 32
    %v1695 = vpop.permute.xlu0 %1694
    %1696 = vrot.lane.b32.xlu0 %v1691, 32
    %v1697 = vpop.permute.xlu0 %1696
    %v1700 = vmul.f32 %v1657, %v1695
    %v1701 = vmul.f32 %v1659, %v1697
    %v1704 = vrot.slane %v1700, 1
    %v1705 = vsel %vm344, %v1701, %v1704
    %1706 = vrot.lane.b32.xlu0 %v1705, 64
    %v1707 = vpop.permute.xlu0 %1706
    %v1708 = vsel %vm132, %v1707, 0
    %1710 = vmatprep.subr.mxu0 0.0
    %1711 = vmatpush1.msra.mxu0 %v1344
    %1712 = vmatprep.subr.mxu0 0.0
    %1713 = vmatpush1.msra.mxu0 %v1345
    %1714 = vmatprep.subr.mxu0 0.0
    %1715 = vmatpush1.msra.mxu0 %v1346
    %1716 = vmatprep.subr.mxu0 0.0
    %1717 = vmatpush1.msra.mxu0 %v1347
    %1718 = vmatprep.subr.mxu0 0.0
    %1719 = vmatpush1.msra.mxu0 0.0
    %1720 = vmatprep.subr.mxu0 0.0
    %1721 = vmatpush1.msra.mxu0 0.0
    %1722 = vmatprep.subr.mxu0 0.0
    %1723 = vmatpush1.msra.mxu0 0.0
    %1724 = vmatprep.subr.mxu0 0.0
    %1725 = vmatpush1.msra.mxu0 0.0
    %1726 = vmatprep.subr.mxu0 0.0
    %1727 = vmatpush1.msra.mxu0 0.0
    %1728 = vmatprep.subr.mxu0 0.0
    %1729 = vmatpush1.msra.mxu0 0.0
    %1730 = vmatprep.subr.mxu0 0.0
    %1731 = vmatpush1.msra.mxu0 0.0
    %1732 = vmatprep.subr.mxu0 0.0
    %1733 = vmatpush1.msra.mxu0 0.0
    %1734 = vmatprep.subr.mxu0 0.0
    %1735 = vmatpush1.msra.mxu0 0.0
    %1736 = vmatprep.subr.mxu0 0.0
    %1737 = vmatpush1.msra.mxu0 0.0
    %1738 = vmatprep.subr.mxu0 0.0
    %1739 = vmatpush1.msra.mxu0 0.0
    %1740 = vmatprep.subr.mxu0 0.0
    %1741 = vmatpush1.msra.mxu0 0.0
    %1742 = vmatprep.subr.mxu0 0.0
    %1743 = vmatpush1.msra.mxu0 0.0
    %1744 = vmatprep.subr.mxu0 0.0
    %1745 = vmatpush1.msra.mxu0 0.0
    %1746 = vmatprep.subr.mxu0 0.0
    %1747 = vmatpush1.msra.mxu0 0.0
    %1748 = vmatprep.subr.mxu0 0.0
    %1749 = vmatpush1.msra.mxu0 0.0
    %1750 = vmatprep.subr.mxu0 0.0
    %1751 = vmatpush1.msra.mxu0 0.0
    %1752 = vmatprep.subr.mxu0 0.0
    %1753 = vmatpush1.msra.mxu0 0.0
    %1754 = vmatprep.subr.mxu0 0.0
    %1755 = vmatpush1.msra.mxu0 0.0
    %1756 = vmatprep.subr.mxu0 0.0
    %1757 = vmatpush1.msra.mxu0 0.0
    %1758 = vmatprep.subr.mxu0 0.0
    %1759 = vmatpush1.msra.mxu0 0.0
    %1760 = vmatprep.subr.mxu0 0.0
    %1761 = vmatpush1.msra.mxu0 0.0
    %1762 = vmatprep.subr.mxu0 0.0
    %1763 = vmatpush1.msra.mxu0 0.0
    %1764 = vmatprep.subr.mxu0 0.0
    %1765 = vmatpush1.msra.mxu0 0.0
    %1766 = vmatprep.subr.mxu0 0.0
    %1767 = vmatpush1.msra.mxu0 0.0
    %1768 = vmatprep.subr.mxu0 0.0
    %1769 = vmatpush1.msra.mxu0 0.0
    %1770 = vmatprep.subr.mxu0 0.0
    %1771 = vmatpush1.msra.mxu0 0.0
    %1772 = vmatprep.subr.mxu0 0.0
    %1773 = vmatpush1.msra.mxu0 0.0
    %1774 = vmatprep.mubr.f32.mxu0 0.0
    %1775 = vmatmul.mubr.f32.gmra.mrb[0].mxu0 %v1708
    %v1776 = vpop.f32.mrb[0].mxu0
    %v1777 = vadd.f32 0.0, %v1776
    %v1778 = vpop.f32.mrb[0].mxu0
    %1779 = vdwg.mxu0
    %v1781 = vrot.slane %v1777, 6
    %v1782 = vrot.slane %v1777, 7
    %v1785 = vadd.f32 %v1432, %v1781
    %v1786 = vadd.f32 %v1437, %v1782
    %v1787 = vxor.u32 %v1785, 2147483648
    %v1788 = vxor.u32 %v1786, 2147483648
    %v1789 = vmul.f32 %v1787, 1.442695
    %v1790 = vpow.pop %v1789
    %v1791 = vmul.f32 %v1788, 1.442695
    %v1792 = vpow.pop %v1791
    %v1793 = vadd.f32 %v1790, 1.0
    %v1794 = vadd.f32 %v1792, 1.0
    %v1795 = vrcp.pop %v1793
    %v1796 = vmul.f32 1.0, %v1795
    %v1797 = vrcp.pop %v1794
    %v1798 = vmul.f32 1.0, %v1797
    %v1799 = vtanh.pop %v1785
    %v1800 = vtanh.pop %v1786
    %v1803 = vrot.slane %v1688, 7
    %v1804 = vrot.slane %v1689, 7
    %v1807 = vmul.f32 %v1796, %v1803
    %v1808 = vmul.f32 %v1798, %v1804
    %1811 = vrot.lane.b32.xlu0 %v1799, 32
    %v1812 = vpop.permute.xlu0 %1811
    %1813 = vrot.lane.b32.xlu0 %v1800, 32
    %v1814 = vpop.permute.xlu0 %1813
    %v1817 = vmul.f32 %v1796, %v1812
    %v1818 = vmul.f32 %v1798, %v1814
    %1821 = vrot.lane.b32.xlu0 %v1817, 32
    %v1822 = vpop.permute.xlu0 %1821
    %1823 = vrot.lane.b32.xlu0 %v1818, 32
    %v1824 = vpop.permute.xlu0 %1823
    %v1827 = vadd.f32 %v1807, %v1822
    %v1828 = vadd.f32 %v1808, %v1824
    %v1829 = vtanh.pop %v1827
    %v1830 = vtanh.pop %v1828
    %1833 = vrot.lane.b32.xlu0 %v1829, 32
    %v1834 = vpop.permute.xlu0 %1833
    %1835 = vrot.lane.b32.xlu0 %v1830, 32
    %v1836 = vpop.permute.xlu0 %1835
    %v1839 = vmul.f32 %v1796, %v1834
    %v1840 = vmul.f32 %v1798, %v1836
    %v1843 = vrot.slane %v1839, 2
    %v1844 = vrot.slane %v1840, 1
    %v1845 = vsel %vm344, %v1844, %v1843
    %1846 = vrot.lane.b32.xlu0 %v1845, 64
    %v1847 = vpop.permute.xlu0 %1846
    %v1848 = vsel %vm132, %v1847, 0
    %1850 = vmatprep.subr.mxu0 0.0
    %1851 = vmatpush1.msra.mxu0 %v1344
    %1852 = vmatprep.subr.mxu0 0.0
    %1853 = vmatpush1.msra.mxu0 %v1345
    %1854 = vmatprep.subr.mxu0 0.0
    %1855 = vmatpush1.msra.mxu0 %v1346
    %1856 = vmatprep.subr.mxu0 0.0
    %1857 = vmatpush1.msra.mxu0 %v1347
    %1858 = vmatprep.subr.mxu0 0.0
    %1859 = vmatpush1.msra.mxu0 0.0
    %1860 = vmatprep.subr.mxu0 0.0
    %1861 = vmatpush1.msra.mxu0 0.0
    %1862 = vmatprep.subr.mxu0 0.0
    %1863 = vmatpush1.msra.mxu0 0.0
    %1864 = vmatprep.subr.mxu0 0.0
    %1865 = vmatpush1.msra.mxu0 0.0
    %1866 = vmatprep.subr.mxu0 0.0
    %1867 = vmatpush1.msra.mxu0 0.0
    %1868 = vmatprep.subr.mxu0 0.0
    %1869 = vmatpush1.msra.mxu0 0.0
    %1870 = vmatprep.subr.mxu0 0.0
    %1871 = vmatpush1.msra.mxu0 0.0
    %1872 = vmatprep.subr.mxu0 0.0
    %1873 = vmatpush1.msra.mxu0 0.0
    %1874 = vmatprep.subr.mxu0 0.0
    %1875 = vmatpush1.msra.mxu0 0.0
    %1876 = vmatprep.subr.mxu0 0.0
    %1877 = vmatpush1.msra.mxu0 0.0
    %1878 = vmatprep.subr.mxu0 0.0
    %1879 = vmatpush1.msra.mxu0 0.0
    %1880 = vmatprep.subr.mxu0 0.0
    %1881 = vmatpush1.msra.mxu0 0.0
    %1882 = vmatprep.subr.mxu0 0.0
    %1883 = vmatpush1.msra.mxu0 0.0
    %1884 = vmatprep.subr.mxu0 0.0
    %1885 = vmatpush1.msra.mxu0 0.0
    %1886 = vmatprep.subr.mxu0 0.0
    %1887 = vmatpush1.msra.mxu0 0.0
    %1888 = vmatprep.subr.mxu0 0.0
    %1889 = vmatpush1.msra.mxu0 0.0
    %1890 = vmatprep.subr.mxu0 0.0
    %1891 = vmatpush1.msra.mxu0 0.0
    %1892 = vmatprep.subr.mxu0 0.0
    %1893 = vmatpush1.msra.mxu0 0.0
    %1894 = vmatprep.subr.mxu0 0.0
    %1895 = vmatpush1.msra.mxu0 0.0
    %1896 = vmatprep.subr.mxu0 0.0
    %1897 = vmatpush1.msra.mxu0 0.0
    %1898 = vmatprep.subr.mxu0 0.0
    %1899 = vmatpush1.msra.mxu0 0.0
    %1900 = vmatprep.subr.mxu0 0.0
    %1901 = vmatpush1.msra.mxu0 0.0
    %1902 = vmatprep.subr.mxu0 0.0
    %1903 = vmatpush1.msra.mxu0 0.0
    %1904 = vmatprep.subr.mxu0 0.0
    %1905 = vmatpush1.msra.mxu0 0.0
    %1906 = vmatprep.subr.mxu0 0.0
    %1907 = vmatpush1.msra.mxu0 0.0
    %1908 = vmatprep.subr.mxu0 0.0
    %1909 = vmatpush1.msra.mxu0 0.0
    %1910 = vmatprep.subr.mxu0 0.0
    %1911 = vmatpush1.msra.mxu0 0.0
    %1912 = vmatprep.subr.mxu0 0.0
    %1913 = vmatpush1.msra.mxu0 0.0
    %1914 = vmatprep.mubr.f32.mxu0 0.0
    %1915 = vmatmul.mubr.f32.gmra.mrb[0].mxu0 %v1848
    %v1916 = vpop.f32.mrb[0].mxu0
    %v1917 = vadd.f32 0.0, %v1916
    %v1918 = vpop.f32.mrb[0].mxu0
    %1919 = vdwg.mxu0
    %v1921 = vrot.slane %v1917, 5
    %v1922 = vrot.slane %v1917, 6
    %v1925 = vadd.f32 %v1432, %v1921
    %v1926 = vadd.f32 %v1437, %v1922
    %v1927 = vxor.u32 %v1925, 2147483648
    %v1928 = vxor.u32 %v1926, 2147483648
    %v1929 = vmul.f32 %v1927, 1.442695
    %v1930 = vpow.pop %v1929
    %v1931 = vmul.f32 %v1928, 1.442695
    %v1932 = vpow.pop %v1931
    %v1933 = vadd.f32 %v1930, 1.0
    %v1934 = vadd.f32 %v1932, 1.0
    %v1935 = vrcp.pop %v1933
    %v1936 = vmul.f32 1.0, %v1935
    %v1937 = vrcp.pop %v1934
    %v1938 = vmul.f32 1.0, %v1937
    %v1939 = vtanh.pop %v1925
    %v1940 = vtanh.pop %v1926
    %v1943 = vrot.slane %v1827, 7
    %v1944 = vrot.slane %v1828, 7
    %v1947 = vmul.f32 %v1936, %v1943
    %v1948 = vmul.f32 %v1938, %v1944
    %1951 = vrot.lane.b32.xlu0 %v1939, 32
    %v1952 = vpop.permute.xlu0 %1951
    %1953 = vrot.lane.b32.xlu0 %v1940, 32
    %v1954 = vpop.permute.xlu0 %1953
    %v1957 = vmul.f32 %v1936, %v1952
    %v1958 = vmul.f32 %v1938, %v1954
    %1961 = vrot.lane.b32.xlu0 %v1957, 32
    %v1962 = vpop.permute.xlu0 %1961
    %1963 = vrot.lane.b32.xlu0 %v1958, 32
    %v1964 = vpop.permute.xlu0 %1963
    %v1967 = vadd.f32 %v1947, %v1962
    %v1968 = vadd.f32 %v1948, %v1964
    %v1969 = vtanh.pop %v1967
    %v1970 = vtanh.pop %v1968
    %1973 = vrot.lane.b32.xlu0 %v1969, 32
    %v1974 = vpop.permute.xlu0 %1973
    %1975 = vrot.lane.b32.xlu0 %v1970, 32
    %v1976 = vpop.permute.xlu0 %1975
    %v1979 = vmul.f32 %v1936, %v1974
    %v1980 = vmul.f32 %v1938, %v1976
    %v1983 = vrot.slane %v1979, 3
    %v1984 = vrot.slane %v1980, 2
    %v1985 = vsel %vm344, %v1984, %v1983
    %1986 = vrot.lane.b32.xlu0 %v1985, 64
    %v1987 = vpop.permute.xlu0 %1986
    %v1988 = vsel %vm132, %v1987, 0
    %1990 = vmatprep.subr.mxu0 0.0
    %1991 = vmatpush1.msra.mxu0 %v1344
    %1992 = vmatprep.subr.mxu0 0.0
    %1993 = vmatpush1.msra.mxu0 %v1345
    %1994 = vmatprep.subr.mxu0 0.0
    %1995 = vmatpush1.msra.mxu0 %v1346
    %1996 = vmatprep.subr.mxu0 0.0
    %1997 = vmatpush1.msra.mxu0 %v1347
    %1998 = vmatprep.subr.mxu0 0.0
    %1999 = vmatpush1.msra.mxu0 0.0
    %2000 = vmatprep.subr.mxu0 0.0
    %2001 = vmatpush1.msra.mxu0 0.0
    %2002 = vmatprep.subr.mxu0 0.0
    %2003 = vmatpush1.msra.mxu0 0.0
    %2004 = vmatprep.subr.mxu0 0.0
    %2005 = vmatpush1.msra.mxu0 0.0
    %2006 = vmatprep.subr.mxu0 0.0
    %2007 = vmatpush1.msra.mxu0 0.0
    %2008 = vmatprep.subr.mxu0 0.0
    %2009 = vmatpush1.msra.mxu0 0.0
    %2010 = vmatprep.subr.mxu0 0.0
    %2011 = vmatpush1.msra.mxu0 0.0
    %2012 = vmatprep.subr.mxu0 0.0
    %2013 = vmatpush1.msra.mxu0 0.0
    %2014 = vmatprep.subr.mxu0 0.0
    %2015 = vmatpush1.msra.mxu0 0.0
    %2016 = vmatprep.subr.mxu0 0.0
    %2017 = vmatpush1.msra.mxu0 0.0
    %2018 = vmatprep.subr.mxu0 0.0
    %2019 = vmatpush1.msra.mxu0 0.0
    %2020 = vmatprep.subr.mxu0 0.0
    %2021 = vmatpush1.msra.mxu0 0.0
    %2022 = vmatprep.subr.mxu0 0.0
    %2023 = vmatpush1.msra.mxu0 0.0
    %2024 = vmatprep.subr.mxu0 0.0
    %2025 = vmatpush1.msra.mxu0 0.0
    %2026 = vmatprep.subr.mxu0 0.0
    %2027 = vmatpush1.msra.mxu0 0.0
    %2028 = vmatprep.subr.mxu0 0.0
    %2029 = vmatpush1.msra.mxu0 0.0
    %2030 = vmatprep.subr.mxu0 0.0
    %2031 = vmatpush1.msra.mxu0 0.0
    %2032 = vmatprep.subr.mxu0 0.0
    %2033 = vmatpush1.msra.mxu0 0.0
    %2034 = vmatprep.subr.mxu0 0.0
    %2035 = vmatpush1.msra.mxu0 0.0
    %2036 = vmatprep.subr.mxu0 0.0
    %2037 = vmatpush1.msra.mxu0 0.0
    %2038 = vmatprep.subr.mxu0 0.0
    %2039 = vmatpush1.msra.mxu0 0.0
    %2040 = vmatprep.subr.mxu0 0.0
    %2041 = vmatpush1.msra.mxu0 0.0
    %2042 = vmatprep.subr.mxu0 0.0
    %2043 = vmatpush1.msra.mxu0 0.0
    %2044 = vmatprep.subr.mxu0 0.0
    %2045 = vmatpush1.msra.mxu0 0.0
    %2046 = vmatprep.subr.mxu0 0.0
    %2047 = vmatpush1.msra.mxu0 0.0
    %2048 = vmatprep.subr.mxu0 0.0
    %2049 = vmatpush1.msra.mxu0 0.0
    %2050 = vmatprep.subr.mxu0 0.0
    %2051 = vmatpush1.msra.mxu0 0.0
    %2052 = vmatprep.subr.mxu0 0.0
    %2053 = vmatpush1.msra.mxu0 0.0
    %2054 = vmatprep.mubr.f32.mxu0 0.0
    %2055 = vmatmul.mubr.f32.gmra.mrb[0].mxu0 %v1988
    %v2056 = vpop.f32.mrb[0].mxu0
    %v2057 = vadd.f32 0.0, %v2056
    %v2058 = vpop.f32.mrb[0].mxu0
    %2059 = vdwg.mxu0
    %v2061 = vrot.slane %v2057, 4
    %v2062 = vrot.slane %v2057, 5
    %v2065 = vadd.f32 %v1432, %v2061
    %v2066 = vadd.f32 %v1437, %v2062
    %v2067 = vxor.u32 %v2065, 2147483648
    %v2068 = vxor.u32 %v2066, 2147483648
    %v2069 = vmul.f32 %v2067, 1.442695
    %v2070 = vpow.pop %v2069
    %v2071 = vmul.f32 %v2068, 1.442695
    %v2072 = vpow.pop %v2071
    %v2073 = vadd.f32 %v2070, 1.0
    %v2074 = vadd.f32 %v2072, 1.0
    %v2075 = vrcp.pop %v2073
    %v2076 = vmul.f32 1.0, %v2075
    %v2077 = vrcp.pop %v2074
    %v2078 = vmul.f32 1.0, %v2077
    %v2079 = vtanh.pop %v2065
    %v2080 = vtanh.pop %v2066
    %v2083 = vrot.slane %v1967, 7
    %v2084 = vrot.slane %v1968, 7
    %v2087 = vmul.f32 %v2076, %v2083
    %v2088 = vmul.f32 %v2078, %v2084
    %2091 = vrot.lane.b32.xlu0 %v2079, 32
    %v2092 = vpop.permute.xlu0 %2091
    %2093 = vrot.lane.b32.xlu0 %v2080, 32
    %v2094 = vpop.permute.xlu0 %2093
    %v2097 = vmul.f32 %v2076, %v2092
    %v2098 = vmul.f32 %v2078, %v2094
    %2101 = vrot.lane.b32.xlu0 %v2097, 32
    %v2102 = vpop.permute.xlu0 %2101
    %2103 = vrot.lane.b32.xlu0 %v2098, 32
    %v2104 = vpop.permute.xlu0 %2103
    %v2107 = vadd.f32 %v2087, %v2102
    %v2108 = vadd.f32 %v2088, %v2104
    %v2109 = vtanh.pop %v2107
    %v2110 = vtanh.pop %v2108
    %2113 = vrot.lane.b32.xlu0 %v2109, 32
    %v2114 = vpop.permute.xlu0 %2113
    %2115 = vrot.lane.b32.xlu0 %v2110, 32
    %v2116 = vpop.permute.xlu0 %2115
    %v2119 = vmul.f32 %v2076, %v2114
    %v2120 = vmul.f32 %v2078, %v2116
    %v2123 = vrot.slane %v2119, 4
    %v2124 = vrot.slane %v2120, 3
    %v2125 = vsel %vm344, %v2124, %v2123
    %2126 = vrot.lane.b32.xlu0 %v2125, 64
    %v2127 = vpop.permute.xlu0 %2126
    %v2128 = vsel %vm132, %v2127, 0
    %2130 = vmatprep.subr.mxu0 0.0
    %2131 = vmatpush1.msra.mxu0 %v1344
    %2132 = vmatprep.subr.mxu0 0.0
    %2133 = vmatpush1.msra.mxu0 %v1345
    %2134 = vmatprep.subr.mxu0 0.0
    %2135 = vmatpush1.msra.mxu0 %v1346
    %2136 = vmatprep.subr.mxu0 0.0
    %2137 = vmatpush1.msra.mxu0 %v1347
    %2138 = vmatprep.subr.mxu0 0.0
    %2139 = vmatpush1.msra.mxu0 0.0
    %2140 = vmatprep.subr.mxu0 0.0
    %2141 = vmatpush1.msra.mxu0 0.0
    %2142 = vmatprep.subr.mxu0 0.0
    %2143 = vmatpush1.msra.mxu0 0.0
    %2144 = vmatprep.subr.mxu0 0.0
    %2145 = vmatpush1.msra.mxu0 0.0
    %2146 = vmatprep.subr.mxu0 0.0
    %2147 = vmatpush1.msra.mxu0 0.0
    %2148 = vmatprep.subr.mxu0 0.0
    %2149 = vmatpush1.msra.mxu0 0.0
    %2150 = vmatprep.subr.mxu0 0.0
    %2151 = vmatpush1.msra.mxu0 0.0
    %2152 = vmatprep.subr.mxu0 0.0
    %2153 = vmatpush1.msra.mxu0 0.0
    %2154 = vmatprep.subr.mxu0 0.0
    %2155 = vmatpush1.msra.mxu0 0.0
    %2156 = vmatprep.subr.mxu0 0.0
    %2157 = vmatpush1.msra.mxu0 0.0
    %2158 = vmatprep.subr.mxu0 0.0
    %2159 = vmatpush1.msra.mxu0 0.0
    %2160 = vmatprep.subr.mxu0 0.0
    %2161 = vmatpush1.msra.mxu0 0.0
    %2162 = vmatprep.subr.mxu0 0.0
    %2163 = vmatpush1.msra.mxu0 0.0
    %2164 = vmatprep.subr.mxu0 0.0
    %2165 = vmatpush1.msra.mxu0 0.0
    %2166 = vmatprep.subr.mxu0 0.0
    %2167 = vmatpush1.msra.mxu0 0.0
    %2168 = vmatprep.subr.mxu0 0.0
    %2169 = vmatpush1.msra.mxu0 0.0
    %2170 = vmatprep.subr.mxu0 0.0
    %2171 = vmatpush1.msra.mxu0 0.0
    %2172 = vmatprep.subr.mxu0 0.0
    %2173 = vmatpush1.msra.mxu0 0.0
    %2174 = vmatprep.subr.mxu0 0.0
    %2175 = vmatpush1.msra.mxu0 0.0
    %2176 = vmatprep.subr.mxu0 0.0
    %2177 = vmatpush1.msra.mxu0 0.0
    %2178 = vmatprep.subr.mxu0 0.0
    %2179 = vmatpush1.msra.mxu0 0.0
    %2180 = vmatprep.subr.mxu0 0.0
    %2181 = vmatpush1.msra.mxu0 0.0
    %2182 = vmatprep.subr.mxu0 0.0
    %2183 = vmatpush1.msra.mxu0 0.0
    %2184 = vmatprep.subr.mxu0 0.0
    %2185 = vmatpush1.msra.mxu0 0.0
    %2186 = vmatprep.subr.mxu0 0.0
    %2187 = vmatpush1.msra.mxu0 0.0
    %2188 = vmatprep.subr.mxu0 0.0
    %2189 = vmatpush1.msra.mxu0 0.0
    %2190 = vmatprep.subr.mxu0 0.0
    %2191 = vmatpush1.msra.mxu0 0.0
    %2192 = vmatprep.subr.mxu0 0.0
    %2193 = vmatpush1.msra.mxu0 0.0
    %2194 = vmatprep.mubr.f32.mxu0 0.0
    %2195 = vmatmul.mubr.f32.gmra.mrb[0].mxu0 %v2128
    %v2196 = vpop.f32.mrb[0].mxu0
    %v2197 = vadd.f32 0.0, %v2196
    %v2198 = vpop.f32.mrb[0].mxu0
    %2199 = vdwg.mxu0
    %v2201 = vrot.slane %v2197, 3
    %v2202 = vrot.slane %v2197, 4
    %v2205 = vadd.f32 %v1432, %v2201
    %v2206 = vadd.f32 %v1437, %v2202
    %v2207 = vxor.u32 %v2205, 2147483648
    %v2208 = vxor.u32 %v2206, 2147483648
    %v2209 = vmul.f32 %v2207, 1.442695
    %v2210 = vpow.pop %v2209
    %v2211 = vmul.f32 %v2208, 1.442695
    %v2212 = vpow.pop %v2211
    %v2213 = vadd.f32 %v2210, 1.0
    %v2214 = vadd.f32 %v2212, 1.0
    %v2215 = vrcp.pop %v2213
    %v2216 = vmul.f32 1.0, %v2215
    %v2217 = vrcp.pop %v2214
    %v2218 = vmul.f32 1.0, %v2217
    %v2219 = vtanh.pop %v2205
    %v2220 = vtanh.pop %v2206
    %v2223 = vrot.slane %v2107, 7
    %v2224 = vrot.slane %v2108, 7
    %v2227 = vmul.f32 %v2216, %v2223
    %v2228 = vmul.f32 %v2218, %v2224
    %2231 = vrot.lane.b32.xlu0 %v2219, 32
    %v2232 = vpop.permute.xlu0 %2231
    %2233 = vrot.lane.b32.xlu0 %v2220, 32
    %v2234 = vpop.permute.xlu0 %2233
    %v2237 = vmul.f32 %v2216, %v2232
    %v2238 = vmul.f32 %v2218, %v2234
    %2241 = vrot.lane.b32.xlu0 %v2237, 32
    %v2242 = vpop.permute.xlu0 %2241
    %2243 = vrot.lane.b32.xlu0 %v2238, 32
    %v2244 = vpop.permute.xlu0 %2243
    %v2247 = vadd.f32 %v2227, %v2242
    %v2248 = vadd.f32 %v2228, %v2244
    %v2249 = vtanh.pop %v2247
    %v2250 = vtanh.pop %v2248
    %2253 = vrot.lane.b32.xlu0 %v2249, 32
    %v2254 = vpop.permute.xlu0 %2253
    %2255 = vrot.lane.b32.xlu0 %v2250, 32
    %v2256 = vpop.permute.xlu0 %2255
    %v2259 = vmul.f32 %v2216, %v2254
    %v2260 = vmul.f32 %v2218, %v2256
    %v2263 = vrot.slane %v2259, 5
    %v2264 = vrot.slane %v2260, 4
    %v2265 = vsel %vm344, %v2264, %v2263
    %2266 = vrot.lane.b32.xlu0 %v2265, 64
    %v2267 = vpop.permute.xlu0 %2266
    %v2268 = vsel %vm132, %v2267, 0
    %2270 = vmatprep.subr.mxu0 0.0
    %2271 = vmatpush1.msra.mxu0 %v1344
    %2272 = vmatprep.subr.mxu0 0.0
    %2273 = vmatpush1.msra.mxu0 %v1345
    %2274 = vmatprep.subr.mxu0 0.0
    %2275 = vmatpush1.msra.mxu0 %v1346
    %2276 = vmatprep.subr.mxu0 0.0
    %2277 = vmatpush1.msra.mxu0 %v1347
    %2278 = vmatprep.subr.mxu0 0.0
    %2279 = vmatpush1.msra.mxu0 0.0
    %2280 = vmatprep.subr.mxu0 0.0
    %2281 = vmatpush1.msra.mxu0 0.0
    %2282 = vmatprep.subr.mxu0 0.0
    %2283 = vmatpush1.msra.mxu0 0.0
    %2284 = vmatprep.subr.mxu0 0.0
    %2285 = vmatpush1.msra.mxu0 0.0
    %2286 = vmatprep.subr.mxu0 0.0
    %2287 = vmatpush1.msra.mxu0 0.0
    %2288 = vmatprep.subr.mxu0 0.0
    %2289 = vmatpush1.msra.mxu0 0.0
    %2290 = vmatprep.subr.mxu0 0.0
    %2291 = vmatpush1.msra.mxu0 0.0
    %2292 = vmatprep.subr.mxu0 0.0
    %2293 = vmatpush1.msra.mxu0 0.0
    %2294 = vmatprep.subr.mxu0 0.0
    %2295 = vmatpush1.msra.mxu0 0.0
    %2296 = vmatprep.subr.mxu0 0.0
    %2297 = vmatpush1.msra.mxu0 0.0
    %2298 = vmatprep.subr.mxu0 0.0
    %2299 = vmatpush1.msra.mxu0 0.0
    %2300 = vmatprep.subr.mxu0 0.0
    %2301 = vmatpush1.msra.mxu0 0.0
    %2302 = vmatprep.subr.mxu0 0.0
    %2303 = vmatpush1.msra.mxu0 0.0
    %2304 = vmatprep.subr.mxu0 0.0
    %2305 = vmatpush1.msra.mxu0 0.0
    %2306 = vmatprep.subr.mxu0 0.0
    %2307 = vmatpush1.msra.mxu0 0.0
    %2308 = vmatprep.subr.mxu0 0.0
    %2309 = vmatpush1.msra.mxu0 0.0
    %2310 = vmatprep.subr.mxu0 0.0
    %2311 = vmatpush1.msra.mxu0 0.0
    %2312 = vmatprep.subr.mxu0 0.0
    %2313 = vmatpush1.msra.mxu0 0.0
    %2314 = vmatprep.subr.mxu0 0.0
    %2315 = vmatpush1.msra.mxu0 0.0
    %2316 = vmatprep.subr.mxu0 0.0
    %2317 = vmatpush1.msra.mxu0 0.0
    %2318 = vmatprep.subr.mxu0 0.0
    %2319 = vmatpush1.msra.mxu0 0.0
    %2320 = vmatprep.subr.mxu0 0.0
    %2321 = vmatpush1.msra.mxu0 0.0
    %2322 = vmatprep.subr.mxu0 0.0
    %2323 = vmatpush1.msra.mxu0 0.0
    %2324 = vmatprep.subr.mxu0 0.0
    %2325 = vmatpush1.msra.mxu0 0.0
    %2326 = vmatprep.subr.mxu0 0.0
    %2327 = vmatpush1.msra.mxu0 0.0
    %2328 = vmatprep.subr.mxu0 0.0
    %2329 = vmatpush1.msra.mxu0 0.0
    %2330 = vmatprep.subr.mxu0 0.0
    %2331 = vmatpush1.msra.mxu0 0.0
    %2332 = vmatprep.subr.mxu0 0.0
    %2333 = vmatpush1.msra.mxu0 0.0
    %2334 = vmatprep.mubr.f32.mxu0 0.0
    %2335 = vmatmul.mubr.f32.gmra.mrb[0].mxu0 %v2268
    %v2336 = vpop.f32.mrb[0].mxu0
    %v2337 = vadd.f32 0.0, %v2336
    %v2338 = vpop.f32.mrb[0].mxu0
    %2339 = vdwg.mxu0
    %v2341 = vrot.slane %v2337, 2
    %v2342 = vrot.slane %v2337, 3
    %v2345 = vadd.f32 %v1432, %v2341
    %v2346 = vadd.f32 %v1437, %v2342
    %v2347 = vxor.u32 %v2345, 2147483648
    %v2348 = vxor.u32 %v2346, 2147483648
    %v2349 = vmul.f32 %v2347, 1.442695
    %v2350 = vpow.pop %v2349
    %v2351 = vmul.f32 %v2348, 1.442695
    %v2352 = vpow.pop %v2351
    %v2353 = vadd.f32 %v2350, 1.0
    %v2354 = vadd.f32 %v2352, 1.0
    %v2355 = vrcp.pop %v2353
    %v2356 = vmul.f32 1.0, %v2355
    %v2357 = vrcp.pop %v2354
    %v2358 = vmul.f32 1.0, %v2357
    %v2359 = vtanh.pop %v2345
    %v2360 = vtanh.pop %v2346
    %v2363 = vrot.slane %v2247, 7
    %v2364 = vrot.slane %v2248, 7
    %v2367 = vmul.f32 %v2356, %v2363
    %v2368 = vmul.f32 %v2358, %v2364
    %2371 = vrot.lane.b32.xlu0 %v2359, 32
    %v2372 = vpop.permute.xlu0 %2371
    %2373 = vrot.lane.b32.xlu0 %v2360, 32
    %v2374 = vpop.permute.xlu0 %2373
    %v2377 = vmul.f32 %v2356, %v2372
    %v2378 = vmul.f32 %v2358, %v2374
    %2381 = vrot.lane.b32.xlu0 %v2377, 32
    %v2382 = vpop.permute.xlu0 %2381
    %2383 = vrot.lane.b32.xlu0 %v2378, 32
    %v2384 = vpop.permute.xlu0 %2383
    %v2387 = vadd.f32 %v2367, %v2382
    %v2388 = vadd.f32 %v2368, %v2384
    %v2389 = vtanh.pop %v2387
    %v2390 = vtanh.pop %v2388
    %2393 = vrot.lane.b32.xlu0 %v2389, 32
    %v2394 = vpop.permute.xlu0 %2393
    %2395 = vrot.lane.b32.xlu0 %v2390, 32
    %v2396 = vpop.permute.xlu0 %2395
    %v2399 = vmul.f32 %v2356, %v2394
    %v2400 = vmul.f32 %v2358, %v2396
    %v2403 = vrot.slane %v2399, 6
    %v2404 = vrot.slane %v2400, 5
    %v2405 = vsel %vm344, %v2404, %v2403
    %2406 = vrot.lane.b32.xlu0 %v2405, 64
    %v2407 = vpop.permute.xlu0 %2406
    %v2408 = vsel %vm132, %v2407, 0
    %2410 = vmatprep.subr.mxu0 0.0
    %2411 = vmatpush1.msra.mxu0 %v1344
    %2412 = vmatprep.subr.mxu0 0.0
    %2413 = vmatpush1.msra.mxu0 %v1345
    %2414 = vmatprep.subr.mxu0 0.0
    %2415 = vmatpush1.msra.mxu0 %v1346
    %2416 = vmatprep.subr.mxu0 0.0
    %2417 = vmatpush1.msra.mxu0 %v1347
    %2418 = vmatprep.subr.mxu0 0.0
    %2419 = vmatpush1.msra.mxu0 0.0
    %2420 = vmatprep.subr.mxu0 0.0
    %2421 = vmatpush1.msra.mxu0 0.0
    %2422 = vmatprep.subr.mxu0 0.0
    %2423 = vmatpush1.msra.mxu0 0.0
    %2424 = vmatprep.subr.mxu0 0.0
    %2425 = vmatpush1.msra.mxu0 0.0
    %2426 = vmatprep.subr.mxu0 0.0
    %2427 = vmatpush1.msra.mxu0 0.0
    %2428 = vmatprep.subr.mxu0 0.0
    %2429 = vmatpush1.msra.mxu0 0.0
    %2430 = vmatprep.subr.mxu0 0.0
    %2431 = vmatpush1.msra.mxu0 0.0
    %2432 = vmatprep.subr.mxu0 0.0
    %2433 = vmatpush1.msra.mxu0 0.0
    %2434 = vmatprep.subr.mxu0 0.0
    %2435 = vmatpush1.msra.mxu0 0.0
    %2436 = vmatprep.subr.mxu0 0.0
    %2437 = vmatpush1.msra.mxu0 0.0
    %2438 = vmatprep.subr.mxu0 0.0
    %2439 = vmatpush1.msra.mxu0 0.0
    %2440 = vmatprep.subr.mxu0 0.0
    %2441 = vmatpush1.msra.mxu0 0.0
    %2442 = vmatprep.subr.mxu0 0.0
    %2443 = vmatpush1.msra.mxu0 0.0
    %2444 = vmatprep.subr.mxu0 0.0
    %2445 = vmatpush1.msra.mxu0 0.0
    %2446 = vmatprep.subr.mxu0 0.0
    %2447 = vmatpush1.msra.mxu0 0.0
    %2448 = vmatprep.subr.mxu0 0.0
    %2449 = vmatpush1.msra.mxu0 0.0
    %2450 = vmatprep.subr.mxu0 0.0
    %2451 = vmatpush1.msra.mxu0 0.0
    %2452 = vmatprep.subr.mxu0 0.0
    %2453 = vmatpush1.msra.mxu0 0.0
    %2454 = vmatprep.subr.mxu0 0.0
    %2455 = vmatpush1.msra.mxu0 0.0
    %2456 = vmatprep.subr.mxu0 0.0
    %2457 = vmatpush1.msra.mxu0 0.0
    %2458 = vmatprep.subr.mxu0 0.0
    %2459 = vmatpush1.msra.mxu0 0.0
    %2460 = vmatprep.subr.mxu0 0.0
    %2461 = vmatpush1.msra.mxu0 0.0
    %2462 = vmatprep.subr.mxu0 0.0
    %2463 = vmatpush1.msra.mxu0 0.0
    %2464 = vmatprep.subr.mxu0 0.0
    %2465 = vmatpush1.msra.mxu0 0.0
    %2466 = vmatprep.subr.mxu0 0.0
    %2467 = vmatpush1.msra.mxu0 0.0
    %2468 = vmatprep.subr.mxu0 0.0
    %2469 = vmatpush1.msra.mxu0 0.0
    %2470 = vmatprep.subr.mxu0 0.0
    %2471 = vmatpush1.msra.mxu0 0.0
    %2472 = vmatprep.subr.mxu0 0.0
    %2473 = vmatpush1.msra.mxu0 0.0
    %2474 = vmatprep.mubr.f32.mxu0 0.0
    %2475 = vmatmul.mubr.f32.gmra.mrb[0].mxu0 %v2408
    %v2476 = vpop.f32.mrb[0].mxu0
    %v2477 = vadd.f32 0.0, %v2476
    %v2478 = vpop.f32.mrb[0].mxu0
    %2479 = vdwg.mxu0
    %v2481 = vrot.slane %v2477, 1
    %v2482 = vrot.slane %v2477, 2
    %v2485 = vadd.f32 %v1432, %v2481
    %v2486 = vadd.f32 %v1437, %v2482
    %v2487 = vxor.u32 %v2485, 2147483648
    %v2488 = vxor.u32 %v2486, 2147483648
    %v2489 = vmul.f32 %v2487, 1.442695
    %v2490 = vpow.pop %v2489
    %v2491 = vmul.f32 %v2488, 1.442695
    %v2492 = vpow.pop %v2491
    %v2493 = vadd.f32 %v2490, 1.0
    %v2494 = vadd.f32 %v2492, 1.0
    %v2495 = vrcp.pop %v2493
    %v2496 = vmul.f32 1.0, %v2495
    %v2497 = vrcp.pop %v2494
    %v2498 = vmul.f32 1.0, %v2497
    %v2499 = vtanh.pop %v2485
    %v2500 = vtanh.pop %v2486
    %v2503 = vrot.slane %v2387, 7
    %v2504 = vrot.slane %v2388, 7
    %v2507 = vmul.f32 %v2496, %v2503
    %v2508 = vmul.f32 %v2498, %v2504
    %2511 = vrot.lane.b32.xlu0 %v2499, 32
    %v2512 = vpop.permute.xlu0 %2511
    %2513 = vrot.lane.b32.xlu0 %v2500, 32
    %v2514 = vpop.permute.xlu0 %2513
    %v2517 = vmul.f32 %v2496, %v2512
    %v2518 = vmul.f32 %v2498, %v2514
    %2521 = vrot.lane.b32.xlu0 %v2517, 32
    %v2522 = vpop.permute.xlu0 %2521
    %2523 = vrot.lane.b32.xlu0 %v2518, 32
    %v2524 = vpop.permute.xlu0 %2523
    %v2527 = vadd.f32 %v2507, %v2522
    %v2528 = vadd.f32 %v2508, %v2524
    %v2529 = vtanh.pop %v2527
    %v2530 = vtanh.pop %v2528
    %2533 = vrot.lane.b32.xlu0 %v2529, 32
    %v2534 = vpop.permute.xlu0 %2533
    %2535 = vrot.lane.b32.xlu0 %v2530, 32
    %v2536 = vpop.permute.xlu0 %2535
    %v2539 = vmul.f32 %v2496, %v2534
    %v2540 = vmul.f32 %v2498, %v2536
    %v2541 = vsel %vm1319, %v1562, %v1700
    %v2542 = vsel %vm1319, %v1563, %v1701
    %v2543 = vsel %vm1322, %v2541, %v1839
    %v2544 = vsel %vm1322, %v2542, %v1840
    %v2545 = vsel %vm1325, %v2543, %v1979
    %v2546 = vsel %vm1325, %v2544, %v1980
    %v2547 = vsel %vm1328, %v2545, %v2119
    %v2548 = vsel %vm1328, %v2546, %v2120
    %v2549 = vsel %vm1331, %v2547, %v2259
    %v2550 = vsel %vm1331, %v2548, %v2260
    %v2551 = vsel %vm1334, %v2549, %v2399
    %v2552 = vsel %vm1334, %v2550, %v2400
    %v2553 = vsel %vm1337, %v2551, %v2539
    %v2554 = vsel %vm1337, %v2552, %v2540
    %v2555 = vld [vmem:[#allocation11] sm:$0xff]
    %v2556 = vld [vmem:[#allocation11 + $0x8] sm:$0xff]
    %v2557 = vld [vmem:[#allocation11 + $0x10] sm:$0xff]
    %v2558 = vld [vmem:[#allocation11 + $0x18] sm:$0xff]
    %v2559 = vld [vmem:[%s8] sm:$0x1]
    %v2561 = vlaneseq
    %v2562 = vshrl.u32 %v2561, 7
    %v2563 = vsub.s32 0, %v2562
    %v2564 = vrot.slane %v2559, %v2563
    %2568 = vrot.lane.b32.xlu0 %v2553, 64
    %v2569 = vpop.permute.xlu0 %2568
    %2570 = vrot.lane.b32.xlu0 %v2554, 64
    %v2571 = vpop.permute.xlu0 %2570
    %v2572 = vsel %vm132, %v2569, 0
    %v2574 = vsel %vm132, %v2571, 0
    %2576 = vmatprep.subr.mxu0 0.0
    %2577 = vmatpush1.msra.mxu0 %v2555
    %2578 = vmatprep.subr.mxu0 0.0
    %2579 = vmatpush1.msra.mxu0 %v2556
    %2580 = vmatprep.subr.mxu0 0.0
    %2581 = vmatpush1.msra.mxu0 %v2557
    %2582 = vmatprep.subr.mxu0 0.0
    %2583 = vmatpush1.msra.mxu0 %v2558
    %2584 = vmatprep.subr.mxu0 0.0
    %2585 = vmatpush1.msra.mxu0 0.0
    %2586 = vmatprep.subr.mxu0 0.0
    %2587 = vmatpush1.msra.mxu0 0.0
    %2588 = vmatprep.subr.mxu0 0.0
    %2589 = vmatpush1.msra.mxu0 0.0
    %2590 = vmatprep.subr.mxu0 0.0
    %2591 = vmatpush1.msra.mxu0 0.0
    %2592 = vmatprep.subr.mxu0 0.0
    %2593 = vmatpush1.msra.mxu0 0.0
    %2594 = vmatprep.subr.mxu0 0.0
    %2595 = vmatpush1.msra.mxu0 0.0
    %2596 = vmatprep.subr.mxu0 0.0
    %2597 = vmatpush1.msra.mxu0 0.0
    %2598 = vmatprep.subr.mxu0 0.0
    %2599 = vmatpush1.msra.mxu0 0.0
    %2600 = vmatprep.subr.mxu0 0.0
    %2601 = vmatpush1.msra.mxu0 0.0
    %2602 = vmatprep.subr.mxu0 0.0
    %2603 = vmatpush1.msra.mxu0 0.0
    %2604 = vmatprep.subr.mxu0 0.0
    %2605 = vmatpush1.msra.mxu0 0.0
    %2606 = vmatprep.subr.mxu0 0.0
    %2607 = vmatpush1.msra.mxu0 0.0
    %2608 = vmatprep.subr.mxu0 0.0
    %2609 = vmatpush1.msra.mxu0 0.0
    %2610 = vmatprep.subr.mxu0 0.0
    %2611 = vmatpush1.msra.mxu0 0.0
    %2612 = vmatprep.subr.mxu0 0.0
    %2613 = vmatpush1.msra.mxu0 0.0
    %2614 = vmatprep.subr.mxu0 0.0
    %2615 = vmatpush1.msra.mxu0 0.0
    %2616 = vmatprep.subr.mxu0 0.0
    %2617 = vmatpush1.msra.mxu0 0.0
    %2618 = vmatprep.subr.mxu0 0.0
    %2619 = vmatpush1.msra.mxu0 0.0
    %2620 = vmatprep.subr.mxu0 0.0
    %2621 = vmatpush1.msra.mxu0 0.0
    %2622 = vmatprep.subr.mxu0 0.0
    %2623 = vmatpush1.msra.mxu0 0.0
    %2624 = vmatprep.subr.mxu0 0.0
    %2625 = vmatpush1.msra.mxu0 0.0
    %2626 = vmatprep.subr.mxu0 0.0
    %2627 = vmatpush1.msra.mxu0 0.0
    %2628 = vmatprep.subr.mxu0 0.0
    %2629 = vmatpush1.msra.mxu0 0.0
    %2630 = vmatprep.subr.mxu0 0.0
    %2631 = vmatpush1.msra.mxu0 0.0
    %2632 = vmatprep.subr.mxu0 0.0
    %2633 = vmatpush1.msra.mxu0 0.0
    %2634 = vmatprep.subr.mxu0 0.0
    %2635 = vmatpush1.msra.mxu0 0.0
    %2636 = vmatprep.subr.mxu0 0.0
    %2637 = vmatpush1.msra.mxu0 0.0
    %2638 = vmatprep.subr.mxu0 0.0
    %2639 = vmatpush1.msra.mxu0 0.0
    %2640 = vmatprep.mubr.f32.mxu0 0.0
    %2641 = vmatmul.mubr.f32.gmra.mrb[0].mxu0 %v2572
    %v2642 = vpop.f32.mrb[0].mxu0
    %v2643 = vadd.f32 %v2564, %v2642
    %v2644 = vpop.f32.mrb[0].mxu0
    %2645 = vmatprep.mubr.f32.mxu0 0.0
    %2646 = vmatmul.mubr.f32.gmra.mrb[0].mxu0 %v2574
    %v2647 = vpop.f32.mrb[0].mxu0
    %v2648 = vadd.f32 %v2564, %v2647
    %v2649 = vpop.f32.mrb[0].mxu0
    %2650 = vdwg.mxu0
    %2651 = vst.msk [vmem:[#allocation13] sm:$0xff] %vm132, %v2643
    %2652 = vst.msk [vmem:[#allocation13 + $0x8] sm:$0xff] %vm132, %v2648
    // Predicated region
    $region62: #{lstm_module_forward_pallas.1} parent=1 // pred_check
      _
    $region63: #{lstm_module_forward_pallas.1} parent=1 // pred_check_branch
      %2654 = sbr.rel (0) target = $region65
    $region64: #{lstm_module_forward_pallas.1} parent=1 // pred_region
      %s2656 = ssub.s32 256, 256
      %2657 = vsyncadd [#allocation4], %s2656
      %s2658 = sshll.u32 [#allocation13], 4
      %s2659 = int_to_ptr.vmem [resolvable:$true] %s2658
      %2664 = dma.vmem_to_hbm [thread:$0]  %s2659, 256, %s9, [#allocation4], 128, 128, 8
    $region65: #{lstm_module_forward_pallas.1} parent=1 // pred_fallthru
      _
    // Predicated region
    $region66: #{lstm_module_forward_pallas.1} parent=1 // pred_check
      _
    $region67: #{lstm_module_forward_pallas.1} parent=1 // pred_check_branch
      %2666 = sbr.rel (0) target = $region69
    $region68: #{lstm_module_forward_pallas.1} parent=1 // pred_region
      %2667 = dma.done [#allocation4], 256
    $region69: #{lstm_module_forward_pallas.1} parent=1 // pred_fallthru
      _
    %2668 = vsyncpa [#allocation3], 1
    %2669 = vsyncpa [#allocation6], 1
    %2670 = vsyncpa [#allocation9], 1
    %2671 = vsyncpa [#allocation12], 1
    %2672 = vsyncpa [#allocation4], 1

</llo_original>
